<compile_context>
chip_gen: v7x
topology: tpu7x:2x2x1
jax: 0.10.0
libtpu: 0.0.40
codegen_flags: <defaults>
</compile_context>

<pallas_src>
import functools

import jax
import jax.numpy as jnp
from jax.experimental import pallas as pl
from jax.experimental.pallas import tpu as pltpu

LANE = 128
SUBLANE = 8


def _round_up(x, m):
    return -(-x // m) * m


def _pick_batch_tile(b):
    """Batch tile: fill MXU rows, keep >=2 tiles for v7x megacore when batch allows."""
    bp8 = _round_up(max(b, 1), SUBLANE)
    if bp8 <= 2 * SUBLANE:
        return bp8                       # tiny batch: single tile == full padded batch
    # split into >= 2 tiles; 16-row alignment keeps bf16 sublane packing happy
    tb = _round_up(-(-bp8 // 2), 16)
    return min(256, tb)


def _lstm_kernel(gx_ref, whh_ref, wfc_ref, bfc_ref, out_ref, h_sc, c_sc,
                 *, hp, tt, t_total, needs_mask):
    """One grid step == Tt LSTM time steps for one batch tile.

    gx_ref : (Tt, TB, 4*Hp) bf16  precomputed x-projection + bias, gate order [i,f,o,g]
                                  with the g columns pre-scaled by 2
    whh_ref: (Hp, 4*Hp)     bf16  recurrent weights (same repack / prescale)
    wfc_ref: (Hp, Op)       bf16  fc weights (lane-padded)
    bfc_ref: (1, Op)        f32   fc bias
    h_sc/c_sc: (TB, Hp)     f32   carried state (VMEM scratch, persists over time blocks)
    """
    tb = pl.program_id(1)                       # time-block index (sequential axis)
    n_tb = pl.num_programs(1)

    @pl.when(tb == 0)
    def _():
        h_sc[...] = jnp.zeros_like(h_sc)
        c_sc[...] = jnp.zeros_like(c_sc)

    w_hh = whh_ref[...]                         # hoisted: loaded once per grid step

    def make_step(masked):
        def step(i, carry):
            h32, hb16, c = carry
            # Only the recurrent matmul sits on the serial path (bf16 x bf16 -> f32).
            gates = gx_ref[i].astype(jnp.float32) + jnp.dot(
                hb16, w_hh, preferred_element_type=jnp.float32)
            # ONE wide sigmoid over the whole gates slab; g pre-activation was
            # pre-scaled by 2, so tanh(z) = 2*sigmoid(2z) - 1 reuses the same EUP call.
            sig = jax.nn.sigmoid(gates)
            i_g = sig[:, 0 * hp:1 * hp]
            f_g = sig[:, 1 * hp:2 * hp]
            o_g = sig[:, 2 * hp:3 * hp]
            g_g = 2.0 * sig[:, 3 * hp:4 * hp] - 1.0
            c_new = f_g * c + i_g * g_g
            h_new = o_g * jnp.tanh(c_new)
            if masked:                          # only emitted for the final time block
                valid = (tb * tt + i) < t_total
                h_new = jnp.where(valid, h_new, h32)
                c_new = jnp.where(valid, c_new, c)
            # Cast for the next step's matmul carried here so it can hide under the
            # tanh(c_new) tail instead of sitting in front of the next MXU push.
            return h_new, h_new.astype(w_hh.dtype), c_new
        return step

    def run(masked):
        h0 = h_sc[...]
        c0 = c_sc[...]
        h_f, _, c_f = jax.lax.fori_loop(
            0, tt, make_step(masked), (h0, h0.astype(w_hh.dtype), c0), unroll=True)
        h_sc[...] = h_f
        c_sc[...] = c_f

    if needs_mask:                              # static Python branch (T % Tt != 0)
        @pl.when(tb != n_tb - 1)
        def _():
            run(False)

        @pl.when(tb == n_tb - 1)
        def _():
            run(True)
    else:
        run(False)

    @pl.when(tb == n_tb - 1)
    def _():
        logits = jnp.dot(h_sc[...].astype(wfc_ref.dtype), wfc_ref[...],
                         preferred_element_type=jnp.float32) + bfc_ref[...]
        out_ref[...] = jax.nn.sigmoid(logits)   # lane-dense (TB, Op) store


def _reorder_pad_gate_cols(w, h, hp, g_scale=1.0):
    """Columns of w are (.., 4h) in PyTorch order [i,f,g,o]; return (.., 4hp) in order
    [i,f,o,g], each gate zero-padded from h to hp lanes, g columns scaled by g_scale."""
    gi = w[:, 0 * h:1 * h]
    gf = w[:, 1 * h:2 * h]
    gg = w[:, 2 * h:3 * h] * g_scale
    go = w[:, 3 * h:4 * h]
    pad = lambda blk: jnp.pad(blk, ((0, 0), (0, hp - h)))
    return jnp.concatenate([pad(gi), pad(gf), pad(go), pad(gg)], axis=1)


def prepare_params(params):
    """One-time, weight-only transforms (done once per set of weights)."""
    emb = params["embedding"]                   # (V, E), row 0 (padding_idx) zeros
    w_ih = params["w_ih"]                       # (E, 4H)
    w_hh = params["w_hh"]                       # (H, 4H)
    b = params["b"]                             # (1, 4H) = b_ih + b_hh
    w_fc = params["w_fc"]                       # (H, O)
    b_fc = params["b_fc"]                       # (1, O)

    H = w_hh.shape[0]
    O = w_fc.shape[1]
    Hp = _round_up(max(H, 1), LANE)
    Op = _round_up(max(O, 1), LANE)

    # Fused "embedding + input projection + bias": project the whole table once.
    # g columns pre-scaled by 2 so the kernel recovers tanh from the shared sigmoid.
    w_ih_r = _reorder_pad_gate_cols(w_ih, H, Hp, g_scale=2.0)   # (E, 4Hp)
    b_r = _reorder_pad_gate_cols(b, H, Hp, g_scale=2.0)         # (1, 4Hp)
    table = (emb @ w_ih_r + b_r).astype(jnp.bfloat16)           # (V, 4Hp) bf16 stream

    w_hh_r = _reorder_pad_gate_cols(w_hh, H, Hp, g_scale=2.0)   # (H, 4Hp)
    w_hh_p = jnp.pad(w_hh_r, ((0, Hp - H), (0, 0))).astype(jnp.bfloat16)

    w_fc_p = jnp.pad(w_fc, ((0, Hp - H), (0, Op - O))).astype(jnp.bfloat16)
    b_fc_p = jnp.pad(b_fc, ((0, 0), (0, Op - O))).astype(jnp.float32)

    return {"table": table, "w_hh": w_hh_p, "w_fc": w_fc_p, "b_fc": b_fc_p,
            "hp": Hp, "op": Op, "o": O}


def text_lstm_forward(tokens, prep, *, batch_tile=None, time_tile=32):
    """tokens: int32 (B, T).  Returns sigmoid(fc(h_T)) of shape (B, output_dim)."""
    B, T = tokens.shape
    Hp, Op, O = prep["hp"], prep["op"], prep["o"]

    if batch_tile is None:
        TB = _pick_batch_tile(B)
    else:
        assert batch_tile % SUBLANE == 0, "batch tile must be a multiple of 8 sublanes"
        TB = batch_tile
    Bp = _round_up(B, TB)

    Tt = min(T, time_tile)
    # Keep the double-buffered bf16 gates_x slab under ~24 MiB (v7x 64 MiB VMEM safe).
    while Tt > 1 and 2 * Tt * TB * 4 * Hp * 2 > (24 << 20):
        Tt = max(1, Tt // 2)
    Tp = _round_up(T, Tt)

    # Pad batch/time with padding-token id 0 (extra time steps are masked in the final
    # time block only; extra batch rows are sliced off below).
    tokens_p = jnp.pad(tokens, ((0, Bp - B), (0, Tp - T)))

    # Single gather from the pre-projected bf16 table, already time-major: no (B,T,E)
    # HBM intermediate, no transpose copy, bias already folded in, half the bytes of f32.
    # TODO(synk): move this gather in-kernel (scalar-prefetch tokens + resident table or
    # per-step DMA row gather) to cut gates_x HBM traffic to a single pass.
    gates_x = jnp.take(prep["table"], tokens_p.T, axis=0)        # (Tp, Bp, 4Hp) bf16

    kernel = functools.partial(_lstm_kernel, hp=Hp, tt=Tt, t_total=T,
                               needs_mask=(Tp != T))

    # VMEM budget from the actual buffers (x2 for default double-buffering) + headroom.
    budget = (2 * Tt * TB * 4 * Hp * 2                       # gates_x slab (bf16)
              + 2 * (Hp * 4 * Hp * 2 + Hp * Op * 2 + Op * 4)  # resident weights
              + 2 * TB * Op * 4                               # output tile
              + 2 * TB * Hp * 4)                              # h/c scratch
    vmem_limit = int(min(max(2 * budget, 32 << 20), 96 << 20))

    out = pl.pallas_call(
        kernel,
        out_shape=jax.ShapeDtypeStruct((Bp, Op), jnp.float32),
        grid_spec=pltpu.PrefetchScalarGridSpec(
            num_scalar_prefetch=0,
            grid=(Bp // TB, Tp // Tt),                         # (batch, time-blocks)
            in_specs=[
                pl.BlockSpec((Tt, TB, 4 * Hp), lambda b, t: (t, b, 0)),  # gates_x slab
                pl.BlockSpec((Hp, 4 * Hp), lambda b, t: (0, 0)),         # W_hh (resident)
                pl.BlockSpec((Hp, Op), lambda b, t: (0, 0)),             # fc weight
                pl.BlockSpec((1, Op), lambda b, t: (0, 0)),              # fc bias
            ],
            out_specs=pl.BlockSpec((TB, Op), lambda b, t: (b, 0)),
            scratch_shapes=[
                pltpu.VMEM((TB, Hp), jnp.float32),   # h state (f32)
                pltpu.VMEM((TB, Hp), jnp.float32),   # c state (f32)
            ],
        ),
        compiler_params=pltpu.CompilerParams(
            # batch axis parallel (megacore on v7x), time axis sequential
            dimension_semantics=("parallel", "arbitrary"),
            vmem_limit_bytes=vmem_limit,
            # TODO(synk): on v7x with very large H, single-buffer the resident weight
            # specs (pipeline_mode=pl.Buffered(1)) to halve their VMEM footprint.
        ),
    )(gates_x, prep["w_hh"], prep["w_fc"], prep["b_fc"])

    return out[:B, :O]


def _reference_forward(tokens, params):
    """Pure-JAX reference (lax.scan LSTM over the ORIGINAL f32 params)."""
    emb = params["embedding"]
    embedded = jnp.take(emb, tokens, axis=0)          # (B, T, E)
    H = params["w_hh"].shape[0]
    B = tokens.shape[0]

    def step(carry, x_t):
        h, c = carry
        gates = x_t @ params["w_ih"] + h @ params["w_hh"] + params["b"]
        i = jax.nn.sigmoid(gates[:, 0 * H:1 * H])
        f = jax.nn.sigmoid(gates[:, 1 * H:2 * H])
        g = jnp.tanh(gates[:, 2 * H:3 * H])
        o = jax.nn.sigmoid(gates[:, 3 * H:4 * H])
        c = f * c + i * g
        h = o * jnp.tanh(c)
        return (h, c), None

    init = (jnp.zeros((B, H), jnp.float32), jnp.zeros((B, H), jnp.float32))
    (h_T, _), _ = jax.lax.scan(step, init, jnp.transpose(embedded, (1, 0, 2)))
    return jax.nn.sigmoid(h_T @ params["w_fc"] + params["b_fc"])


def init_params(key, vocab_size, embed_dim, hidden_dim, output_dim):
    ks = jax.random.split(key, 7)
    scale = 0.1
    emb = scale * jax.random.normal(ks[0], (vocab_size, embed_dim), jnp.float32)
    emb = emb.at[0].set(0.0)             # padding_idx = vocab['<pad>'] = 0
    w_ih = scale * jax.random.normal(ks[1], (embed_dim, 4 * hidden_dim), jnp.float32)
    w_hh = scale * jax.random.normal(ks[2], (hidden_dim, 4 * hidden_dim), jnp.float32)
    b_ih = scale * jax.random.normal(ks[3], (1, 4 * hidden_dim), jnp.float32)
    b_hh = scale * jax.random.normal(ks[4], (1, 4 * hidden_dim), jnp.float32)
    w_fc = scale * jax.random.normal(ks[5], (hidden_dim, output_dim), jnp.float32)
    b_fc = scale * jax.random.normal(ks[6], (1, output_dim), jnp.float32)
    return {
        "embedding": emb,
        "w_ih": w_ih,
        "w_hh": w_hh,
        "b": b_ih + b_hh,
        "w_fc": w_fc,
        "b_fc": b_fc,
    }


if __name__ == "__main__":
    vocab_size, embed_dim, hidden_dim, output_dim = 100, 32, 32, 4

    key = jax.random.PRNGKey(0)
    k_tok1, k_tok2, k_par = jax.random.split(key, 3)
    params = init_params(k_par, vocab_size, embed_dim, hidden_dim, output_dim)
    prep = prepare_params(params)        # one-time weight-only transforms

    # Case 1: B=2, T=8 -- no batch/time padding paths.
    tok1 = jax.random.randint(k_tok1, (2, 8), 0, vocab_size, dtype=jnp.int32)
    out1 = jax.block_until_ready(text_lstm_forward(tok1, prep))
    ref1 = _reference_forward(tok1, params)
    assert out1.shape == (2, output_dim)
    # Tolerance covers bf16 gates_x / operands in the recurrent & fc matmuls (f32 accum).
    assert jnp.allclose(out1, ref1, atol=3e-3, rtol=3e-3), "mismatch vs reference (case 1)"

    # Case 2: B=3 (not a multiple of the batch tile), T=11 with time_tile=4 so that
    # T % Tt != 0 -- exercises the batch-pad slice and the final-block time mask.
    tok2 = jax.random.randint(k_tok2, (3, 11), 0, vocab_size, dtype=jnp.int32)
    out2 = jax.block_until_ready(text_lstm_forward(tok2, prep, time_tile=4))
    ref2 = _reference_forward(tok2, params)
    assert out2.shape == (3, output_dim)
    assert jnp.allclose(out2, ref2, atol=3e-3, rtol=3e-3), "mismatch vs reference (case 2)"

    print("KERNEL_OK")
</pallas_src>

<mosaic_0001>
module attributes {stable_mosaic.version = 11 : i64} {
  func.func @_lstm_kernel(%arg0: i32, %arg1: i32, %arg2: memref<8x8x512xbf16, #tpu.memory_space<vmem>>, %arg3: memref<128x512xbf16, #tpu.memory_space<vmem>>, %arg4: memref<128x128xbf16, #tpu.memory_space<vmem>>, %arg5: memref<1x128xf32, #tpu.memory_space<vmem>>, %arg6: memref<8x128xf32, #tpu.memory_space<vmem>>, %arg7: memref<8x128xf32, #tpu.memory_space<vmem>>, %arg8: memref<8x128xf32, #tpu.memory_space<vmem>>) attributes {dimension_semantics = [#tpu.dimension_semantics<parallel>, #tpu.dimension_semantics<arbitrary>], iteration_bounds = array<i64: 1, 1>, scalar_prefetch = 0 : i64, scratch_operands = 2 : i64, tpu.core_type = #tpu.core_type<tc>, window_params = [{transform_indices = @transform_0, window_bounds = array<i64: 8, 8, 512>}, {pipeline_mode = #tpu.pipeline_mode<synchronous>, transform_indices = @transform_1, window_bounds = array<i64: 128, 512>}, {pipeline_mode = #tpu.pipeline_mode<synchronous>, transform_indices = @transform_2, window_bounds = array<i64: 128, 128>}, {pipeline_mode = #tpu.pipeline_mode<synchronous>, transform_indices = @transform_3, window_bounds = array<i64: 1, 128>}, {transform_indices = @transform_4, window_bounds = array<i64: 8, 128>}]} {
    %c0_i32 = arith.constant 0 : i32
    %0 = arith.cmpi eq, %arg1, %c0_i32 : i32
    %1 = arith.extui %0 : i1 to i32
    %c0_i32_0 = arith.constant 0 : i32
    %2 = arith.cmpi ne, %1, %c0_i32_0 : i32
    scf.if %2 {
      %cst_60 = arith.constant 0.000000e+00 : f32
      %212 = vector.broadcast %cst_60 : f32 to vector<8x128xf32>
      %c0_61 = arith.constant 0 : index
      %c0_62 = arith.constant 0 : index
      %213 = vector.load %arg7[%c0_61, %c0_62] : memref<8x128xf32, #tpu.memory_space<vmem>>, vector<8x128xf32>
      tpu.vector_store %arg7[%c0_61, %c0_62], %212 {strides = array<i32>} : memref<8x128xf32, #tpu.memory_space<vmem>>, vector<8x128xf32>,
      %cst_63 = arith.constant 0.000000e+00 : f32
      %214 = vector.broadcast %cst_63 : f32 to vector<8x128xf32>
      %c0_64 = arith.constant 0 : index
      %c0_65 = arith.constant 0 : index
      %215 = vector.load %arg8[%c0_64, %c0_65] : memref<8x128xf32, #tpu.memory_space<vmem>>, vector<8x128xf32>
      tpu.vector_store %arg8[%c0_64, %c0_65], %214 {strides = array<i32>} : memref<8x128xf32, #tpu.memory_space<vmem>>, vector<8x128xf32>,
    } else {
    }
    %c0 = arith.constant 0 : index
    %c0_1 = arith.constant 0 : index
    %3 = vector.load %arg3[%c0, %c0_1] : memref<128x512xbf16, #tpu.memory_space<vmem>>, vector<128x512xbf16>
    %c0_2 = arith.constant 0 : index
    %c0_3 = arith.constant 0 : index
    %4 = vector.load %arg7[%c0_2, %c0_3] : memref<8x128xf32, #tpu.memory_space<vmem>>, vector<8x128xf32>
    %c0_4 = arith.constant 0 : index
    %c0_5 = arith.constant 0 : index
    %5 = vector.load %arg8[%c0_4, %c0_5] : memref<8x128xf32, #tpu.memory_space<vmem>>, vector<8x128xf32>
    %6 = arith.truncf %4 : vector<8x128xf32> to vector<8x128xbf16>
    %c0_i32_6 = arith.constant 0 : i32
    %7 = arith.index_cast %c0_i32_6 : i32 to index
    %c0_7 = arith.constant 0 : index
    %c0_8 = arith.constant 0 : index
    %8 = vector.load %arg2[%7, %c0_7, %c0_8] : memref<8x8x512xbf16, #tpu.memory_space<vmem>>, vector<1x8x512xbf16>
    %9 = vector.shape_cast %8 : vector<1x8x512xbf16> to vector<8x512xbf16>
    %10 = arith.extf %9 : vector<8x512xbf16> to vector<8x512xf32>
    %cst = arith.constant dense<0.000000e+00> : vector<8x512xf32>
    %11 = tpu.matmul %6, %3, %cst {dimension_numbers = #tpu.dot_dimension_numbers<[1], [0], [0], [1], [0, 0, 1, 1], [], []>} : vector<8x128xbf16>, vector<128x512xbf16>, vector<8x512xf32> -> vector<8x512xf32>
    %12 = arith.addf %10, %11 : vector<8x512xf32>
    %13 = arith.negf %12 : vector<8x512xf32>
    %14 = math.exp %13 : vector<8x512xf32>
    %cst_9 = arith.constant 1.000000e+00 : f32
    %15 = vector.broadcast %cst_9 : f32 to vector<8x512xf32>
    %16 = arith.addf %15, %14 : vector<8x512xf32>
    %17 = arith.divf %15, %16 : vector<8x512xf32>
    %18 = vector.extract_strided_slice %17 {offsets = [0, 0], sizes = [8, 128], strides = [1, 1]} : vector<8x512xf32> to vector<8x128xf32>
    %19 = vector.extract_strided_slice %17 {offsets = [0, 128], sizes = [8, 128], strides = [1, 1]} : vector<8x512xf32> to vector<8x128xf32>
    %20 = vector.extract_strided_slice %17 {offsets = [0, 256], sizes = [8, 128], strides = [1, 1]} : vector<8x512xf32> to vector<8x128xf32>
    %21 = vector.extract_strided_slice %17 {offsets = [0, 384], sizes = [8, 128], strides = [1, 1]} : vector<8x512xf32> to vector<8x128xf32>
    %cst_10 = arith.constant 2.000000e+00 : f32
    %22 = vector.broadcast %cst_10 : f32 to vector<8x128xf32>
    %23 = arith.mulf %22, %21 : vector<8x128xf32>
    %cst_11 = arith.constant 1.000000e+00 : f32
    %24 = vector.broadcast %cst_11 : f32 to vector<8x128xf32>
    %25 = arith.subf %23, %24 : vector<8x128xf32>
    %26 = arith.mulf %19, %5 : vector<8x128xf32>
    %27 = arith.mulf %18, %25 : vector<8x128xf32>
    %28 = arith.addf %26, %27 : vector<8x128xf32>
    %29 = math.tanh %28 : vector<8x128xf32>
    %30 = arith.mulf %20, %29 : vector<8x128xf32>
    %31 = arith.truncf %30 : vector<8x128xf32> to vector<8x128xbf16>
    %c1_i32 = arith.constant 1 : i32
    %32 = arith.index_cast %c1_i32 : i32 to index
    %c0_12 = arith.constant 0 : index
    %c0_13 = arith.constant 0 : index
    %33 = vector.load %arg2[%32, %c0_12, %c0_13] : memref<8x8x512xbf16, #tpu.memory_space<vmem>>, vector<1x8x512xbf16>
    %34 = vector.shape_cast %33 : vector<1x8x512xbf16> to vector<8x512xbf16>
    %35 = arith.extf %34 : vector<8x512xbf16> to vector<8x512xf32>
    %cst_14 = arith.constant dense<0.000000e+00> : vector<8x512xf32>
    %36 = tpu.matmul %31, %3, %cst_14 {dimension_numbers = #tpu.dot_dimension_numbers<[1], [0], [0], [1], [0, 0, 1, 1], [], []>} : vector<8x128xbf16>, vector<128x512xbf16>, vector<8x512xf32> -> vector<8x512xf32>
    %37 = arith.addf %35, %36 : vector<8x512xf32>
    %38 = arith.negf %37 : vector<8x512xf32>
    %39 = math.exp %38 : vector<8x512xf32>
    %cst_15 = arith.constant 1.000000e+00 : f32
    %40 = vector.broadcast %cst_15 : f32 to vector<8x512xf32>
    %41 = arith.addf %40, %39 : vector<8x512xf32>
    %42 = arith.divf %40, %41 : vector<8x512xf32>
    %43 = vector.extract_strided_slice %42 {offsets = [0, 0], sizes = [8, 128], strides = [1, 1]} : vector<8x512xf32> to vector<8x128xf32>
    %44 = vector.extract_strided_slice %42 {offsets = [0, 128], sizes = [8, 128], strides = [1, 1]} : vector<8x512xf32> to vector<8x128xf32>
    %45 = vector.extract_strided_slice %42 {offsets = [0, 256], sizes = [8, 128], strides = [1, 1]} : vector<8x512xf32> to vector<8x128xf32>
    %46 = vector.extract_strided_slice %42 {offsets = [0, 384], sizes = [8, 128], strides = [1, 1]} : vector<8x512xf32> to vector<8x128xf32>
    %cst_16 = arith.constant 2.000000e+00 : f32
    %47 = vector.broadcast %cst_16 : f32 to vector<8x128xf32>
    %48 = arith.mulf %47, %46 : vector<8x128xf32>
    %cst_17 = arith.constant 1.000000e+00 : f32
    %49 = vector.broadcast %cst_17 : f32 to vector<8x128xf32>
    %50 = arith.subf %48, %49 : vector<8x128xf32>
    %51 = arith.mulf %44, %28 : vector<8x128xf32>
    %52 = arith.mulf %43, %50 : vector<8x128xf32>
    %53 = arith.addf %51, %52 : vector<8x128xf32>
    %54 = math.tanh %53 : vector<8x128xf32>
    %55 = arith.mulf %45, %54 : vector<8x128xf32>
    %56 = arith.truncf %55 : vector<8x128xf32> to vector<8x128xbf16>
    %c2_i32 = arith.constant 2 : i32
    %57 = arith.index_cast %c2_i32 : i32 to index
    %c0_18 = arith.constant 0 : index
    %c0_19 = arith.constant 0 : index
    %58 = vector.load %arg2[%57, %c0_18, %c0_19] : memref<8x8x512xbf16, #tpu.memory_space<vmem>>, vector<1x8x512xbf16>
    %59 = vector.shape_cast %58 : vector<1x8x512xbf16> to vector<8x512xbf16>
    %60 = arith.extf %59 : vector<8x512xbf16> to vector<8x512xf32>
    %cst_20 = arith.constant dense<0.000000e+00> : vector<8x512xf32>
    %61 = tpu.matmul %56, %3, %cst_20 {dimension_numbers = #tpu.dot_dimension_numbers<[1], [0], [0], [1], [0, 0, 1, 1], [], []>} : vector<8x128xbf16>, vector<128x512xbf16>, vector<8x512xf32> -> vector<8x512xf32>
    %62 = arith.addf %60, %61 : vector<8x512xf32>
    %63 = arith.negf %62 : vector<8x512xf32>
    %64 = math.exp %63 : vector<8x512xf32>
    %cst_21 = arith.constant 1.000000e+00 : f32
    %65 = vector.broadcast %cst_21 : f32 to vector<8x512xf32>
    %66 = arith.addf %65, %64 : vector<8x512xf32>
    %67 = arith.divf %65, %66 : vector<8x512xf32>
    %68 = vector.extract_strided_slice %67 {offsets = [0, 0], sizes = [8, 128], strides = [1, 1]} : vector<8x512xf32> to vector<8x128xf32>
    %69 = vector.extract_strided_slice %67 {offsets = [0, 128], sizes = [8, 128], strides = [1, 1]} : vector<8x512xf32> to vector<8x128xf32>
    %70 = vector.extract_strided_slice %67 {offsets = [0, 256], sizes = [8, 128], strides = [1, 1]} : vector<8x512xf32> to vector<8x128xf32>
    %71 = vector.extract_strided_slice %67 {offsets = [0, 384], sizes = [8, 128], strides = [1, 1]} : vector<8x512xf32> to vector<8x128xf32>
    %cst_22 = arith.constant 2.000000e+00 : f32
    %72 = vector.broadcast %cst_22 : f32 to vector<8x128xf32>
    %73 = arith.mulf %72, %71 : vector<8x128xf32>
    %cst_23 = arith.constant 1.000000e+00 : f32
    %74 = vector.broadcast %cst_23 : f32 to vector<8x128xf32>
    %75 = arith.subf %73, %74 : vector<8x128xf32>
    %76 = arith.mulf %69, %53 : vector<8x128xf32>
    %77 = arith.mulf %68, %75 : vector<8x128xf32>
    %78 = arith.addf %76, %77 : vector<8x128xf32>
    %79 = math.tanh %78 : vector<8x128xf32>
    %80 = arith.mulf %70, %79 : vector<8x128xf32>
    %81 = arith.truncf %80 : vector<8x128xf32> to vector<8x128xbf16>
    %c3_i32 = arith.constant 3 : i32
    %82 = arith.index_cast %c3_i32 : i32 to index
    %c0_24 = arith.constant 0 : index
    %c0_25 = arith.constant 0 : index
    %83 = vector.load %arg2[%82, %c0_24, %c0_25] : memref<8x8x512xbf16, #tpu.memory_space<vmem>>, vector<1x8x512xbf16>
    %84 = vector.shape_cast %83 : vector<1x8x512xbf16> to vector<8x512xbf16>
    %85 = arith.extf %84 : vector<8x512xbf16> to vector<8x512xf32>
    %cst_26 = arith.constant dense<0.000000e+00> : vector<8x512xf32>
    %86 = tpu.matmul %81, %3, %cst_26 {dimension_numbers = #tpu.dot_dimension_numbers<[1], [0], [0], [1], [0, 0, 1, 1], [], []>} : vector<8x128xbf16>, vector<128x512xbf16>, vector<8x512xf32> -> vector<8x512xf32>
    %87 = arith.addf %85, %86 : vector<8x512xf32>
    %88 = arith.negf %87 : vector<8x512xf32>
    %89 = math.exp %88 : vector<8x512xf32>
    %cst_27 = arith.constant 1.000000e+00 : f32
    %90 = vector.broadcast %cst_27 : f32 to vector<8x512xf32>
    %91 = arith.addf %90, %89 : vector<8x512xf32>
    %92 = arith.divf %90, %91 : vector<8x512xf32>
    %93 = vector.extract_strided_slice %92 {offsets = [0, 0], sizes = [8, 128], strides = [1, 1]} : vector<8x512xf32> to vector<8x128xf32>
    %94 = vector.extract_strided_slice %92 {offsets = [0, 128], sizes = [8, 128], strides = [1, 1]} : vector<8x512xf32> to vector<8x128xf32>
    %95 = vector.extract_strided_slice %92 {offsets = [0, 256], sizes = [8, 128], strides = [1, 1]} : vector<8x512xf32> to vector<8x128xf32>
    %96 = vector.extract_strided_slice %92 {offsets = [0, 384], sizes = [8, 128], strides = [1, 1]} : vector<8x512xf32> to vector<8x128xf32>
    %cst_28 = arith.constant 2.000000e+00 : f32
    %97 = vector.broadcast %cst_28 : f32 to vector<8x128xf32>
    %98 = arith.mulf %97, %96 : vector<8x128xf32>
    %cst_29 = arith.constant 1.000000e+00 : f32
    %99 = vector.broadcast %cst_29 : f32 to vector<8x128xf32>
    %100 = arith.subf %98, %99 : vector<8x128xf32>
    %101 = arith.mulf %94, %78 : vector<8x128xf32>
    %102 = arith.mulf %93, %100 : vector<8x128xf32>
    %103 = arith.addf %101, %102 : vector<8x128xf32>
    %104 = math.tanh %103 : vector<8x128xf32>
    %105 = arith.mulf %95, %104 : vector<8x128xf32>
    %106 = arith.truncf %105 : vector<8x128xf32> to vector<8x128xbf16>
    %c4_i32 = arith.constant 4 : i32
    %107 = arith.index_cast %c4_i32 : i32 to index
    %c0_30 = arith.constant 0 : index
    %c0_31 = arith.constant 0 : index
    %108 = vector.load %arg2[%107, %c0_30, %c0_31] : memref<8x8x512xbf16, #tpu.memory_space<vmem>>, vector<1x8x512xbf16>
    %109 = vector.shape_cast %108 : vector<1x8x512xbf16> to vector<8x512xbf16>
    %110 = arith.extf %109 : vector<8x512xbf16> to vector<8x512xf32>
    %cst_32 = arith.constant dense<0.000000e+00> : vector<8x512xf32>
    %111 = tpu.matmul %106, %3, %cst_32 {dimension_numbers = #tpu.dot_dimension_numbers<[1], [0], [0], [1], [0, 0, 1, 1], [], []>} : vector<8x128xbf16>, vector<128x512xbf16>, vector<8x512xf32> -> vector<8x512xf32>
    %112 = arith.addf %110, %111 : vector<8x512xf32>
    %113 = arith.negf %112 : vector<8x512xf32>
    %114 = math.exp %113 : vector<8x512xf32>
    %cst_33 = arith.constant 1.000000e+00 : f32
    %115 = vector.broadcast %cst_33 : f32 to vector<8x512xf32>
    %116 = arith.addf %115, %114 : vector<8x512xf32>
    %117 = arith.divf %115, %116 : vector<8x512xf32>
    %118 = vector.extract_strided_slice %117 {offsets = [0, 0], sizes = [8, 128], strides = [1, 1]} : vector<8x512xf32> to vector<8x128xf32>
    %119 = vector.extract_strided_slice %117 {offsets = [0, 128], sizes = [8, 128], strides = [1, 1]} : vector<8x512xf32> to vector<8x128xf32>
    %120 = vector.extract_strided_slice %117 {offsets = [0, 256], sizes = [8, 128], strides = [1, 1]} : vector<8x512xf32> to vector<8x128xf32>
    %121 = vector.extract_strided_slice %117 {offsets = [0, 384], sizes = [8, 128], strides = [1, 1]} : vector<8x512xf32> to vector<8x128xf32>
    %cst_34 = arith.constant 2.000000e+00 : f32
    %122 = vector.broadcast %cst_34 : f32 to vector<8x128xf32>
    %123 = arith.mulf %122, %121 : vector<8x128xf32>
    %cst_35 = arith.constant 1.000000e+00 : f32
    %124 = vector.broadcast %cst_35 : f32 to vector<8x128xf32>
    %125 = arith.subf %123, %124 : vector<8x128xf32>
    %126 = arith.mulf %119, %103 : vector<8x128xf32>
    %127 = arith.mulf %118, %125 : vector<8x128xf32>
    %128 = arith.addf %126, %127 : vector<8x128xf32>
    %129 = math.tanh %128 : vector<8x128xf32>
    %130 = arith.mulf %120, %129 : vector<8x128xf32>
    %131 = arith.truncf %130 : vector<8x128xf32> to vector<8x128xbf16>
    %c5_i32 = arith.constant 5 : i32
    %132 = arith.index_cast %c5_i32 : i32 to index
    %c0_36 = arith.constant 0 : index
    %c0_37 = arith.constant 0 : index
    %133 = vector.load %arg2[%132, %c0_36, %c0_37] : memref<8x8x512xbf16, #tpu.memory_space<vmem>>, vector<1x8x512xbf16>
    %134 = vector.shape_cast %133 : vector<1x8x512xbf16> to vector<8x512xbf16>
    %135 = arith.extf %134 : vector<8x512xbf16> to vector<8x512xf32>
    %cst_38 = arith.constant dense<0.000000e+00> : vector<8x512xf32>
    %136 = tpu.matmul %131, %3, %cst_38 {dimension_numbers = #tpu.dot_dimension_numbers<[1], [0], [0], [1], [0, 0, 1, 1], [], []>} : vector<8x128xbf16>, vector<128x512xbf16>, vector<8x512xf32> -> vector<8x512xf32>
    %137 = arith.addf %135, %136 : vector<8x512xf32>
    %138 = arith.negf %137 : vector<8x512xf32>
    %139 = math.exp %138 : vector<8x512xf32>
    %cst_39 = arith.constant 1.000000e+00 : f32
    %140 = vector.broadcast %cst_39 : f32 to vector<8x512xf32>
    %141 = arith.addf %140, %139 : vector<8x512xf32>
    %142 = arith.divf %140, %141 : vector<8x512xf32>
    %143 = vector.extract_strided_slice %142 {offsets = [0, 0], sizes = [8, 128], strides = [1, 1]} : vector<8x512xf32> to vector<8x128xf32>
    %144 = vector.extract_strided_slice %142 {offsets = [0, 128], sizes = [8, 128], strides = [1, 1]} : vector<8x512xf32> to vector<8x128xf32>
    %145 = vector.extract_strided_slice %142 {offsets = [0, 256], sizes = [8, 128], strides = [1, 1]} : vector<8x512xf32> to vector<8x128xf32>
    %146 = vector.extract_strided_slice %142 {offsets = [0, 384], sizes = [8, 128], strides = [1, 1]} : vector<8x512xf32> to vector<8x128xf32>
    %cst_40 = arith.constant 2.000000e+00 : f32
    %147 = vector.broadcast %cst_40 : f32 to vector<8x128xf32>
    %148 = arith.mulf %147, %146 : vector<8x128xf32>
    %cst_41 = arith.constant 1.000000e+00 : f32
    %149 = vector.broadcast %cst_41 : f32 to vector<8x128xf32>
    %150 = arith.subf %148, %149 : vector<8x128xf32>
    %151 = arith.mulf %144, %128 : vector<8x128xf32>
    %152 = arith.mulf %143, %150 : vector<8x128xf32>
    %153 = arith.addf %151, %152 : vector<8x128xf32>
    %154 = math.tanh %153 : vector<8x128xf32>
    %155 = arith.mulf %145, %154 : vector<8x128xf32>
    %156 = arith.truncf %155 : vector<8x128xf32> to vector<8x128xbf16>
    %c6_i32 = arith.constant 6 : i32
    %157 = arith.index_cast %c6_i32 : i32 to index
    %c0_42 = arith.constant 0 : index
    %c0_43 = arith.constant 0 : index
    %158 = vector.load %arg2[%157, %c0_42, %c0_43] : memref<8x8x512xbf16, #tpu.memory_space<vmem>>, vector<1x8x512xbf16>
    %159 = vector.shape_cast %158 : vector<1x8x512xbf16> to vector<8x512xbf16>
    %160 = arith.extf %159 : vector<8x512xbf16> to vector<8x512xf32>
    %cst_44 = arith.constant dense<0.000000e+00> : vector<8x512xf32>
    %161 = tpu.matmul %156, %3, %cst_44 {dimension_numbers = #tpu.dot_dimension_numbers<[1], [0], [0], [1], [0, 0, 1, 1], [], []>} : vector<8x128xbf16>, vector<128x512xbf16>, vector<8x512xf32> -> vector<8x512xf32>
    %162 = arith.addf %160, %161 : vector<8x512xf32>
    %163 = arith.negf %162 : vector<8x512xf32>
    %164 = math.exp %163 : vector<8x512xf32>
    %cst_45 = arith.constant 1.000000e+00 : f32
    %165 = vector.broadcast %cst_45 : f32 to vector<8x512xf32>
    %166 = arith.addf %165, %164 : vector<8x512xf32>
    %167 = arith.divf %165, %166 : vector<8x512xf32>
    %168 = vector.extract_strided_slice %167 {offsets = [0, 0], sizes = [8, 128], strides = [1, 1]} : vector<8x512xf32> to vector<8x128xf32>
    %169 = vector.extract_strided_slice %167 {offsets = [0, 128], sizes = [8, 128], strides = [1, 1]} : vector<8x512xf32> to vector<8x128xf32>
    %170 = vector.extract_strided_slice %167 {offsets = [0, 256], sizes = [8, 128], strides = [1, 1]} : vector<8x512xf32> to vector<8x128xf32>
    %171 = vector.extract_strided_slice %167 {offsets = [0, 384], sizes = [8, 128], strides = [1, 1]} : vector<8x512xf32> to vector<8x128xf32>
    %cst_46 = arith.constant 2.000000e+00 : f32
    %172 = vector.broadcast %cst_46 : f32 to vector<8x128xf32>
    %173 = arith.mulf %172, %171 : vector<8x128xf32>
    %cst_47 = arith.constant 1.000000e+00 : f32
    %174 = vector.broadcast %cst_47 : f32 to vector<8x128xf32>
    %175 = arith.subf %173, %174 : vector<8x128xf32>
    %176 = arith.mulf %169, %153 : vector<8x128xf32>
    %177 = arith.mulf %168, %175 : vector<8x128xf32>
    %178 = arith.addf %176, %177 : vector<8x128xf32>
    %179 = math.tanh %178 : vector<8x128xf32>
    %180 = arith.mulf %170, %179 : vector<8x128xf32>
    %181 = arith.truncf %180 : vector<8x128xf32> to vector<8x128xbf16>
    %c7_i32 = arith.constant 7 : i32
    %182 = arith.index_cast %c7_i32 : i32 to index
    %c0_48 = arith.constant 0 : index
    %c0_49 = arith.constant 0 : index
    %183 = vector.load %arg2[%182, %c0_48, %c0_49] : memref<8x8x512xbf16, #tpu.memory_space<vmem>>, vector<1x8x512xbf16>
    %184 = vector.shape_cast %183 : vector<1x8x512xbf16> to vector<8x512xbf16>
    %185 = arith.extf %184 : vector<8x512xbf16> to vector<8x512xf32>
    %cst_50 = arith.constant dense<0.000000e+00> : vector<8x512xf32>
    %186 = tpu.matmul %181, %3, %cst_50 {dimension_numbers = #tpu.dot_dimension_numbers<[1], [0], [0], [1], [0, 0, 1, 1], [], []>} : vector<8x128xbf16>, vector<128x512xbf16>, vector<8x512xf32> -> vector<8x512xf32>
    %187 = arith.addf %185, %186 : vector<8x512xf32>
    %188 = arith.negf %187 : vector<8x512xf32>
    %189 = math.exp %188 : vector<8x512xf32>
    %cst_51 = arith.constant 1.000000e+00 : f32
    %190 = vector.broadcast %cst_51 : f32 to vector<8x512xf32>
    %191 = arith.addf %190, %189 : vector<8x512xf32>
    %192 = arith.divf %190, %191 : vector<8x512xf32>
    %193 = vector.extract_strided_slice %192 {offsets = [0, 0], sizes = [8, 128], strides = [1, 1]} : vector<8x512xf32> to vector<8x128xf32>
    %194 = vector.extract_strided_slice %192 {offsets = [0, 128], sizes = [8, 128], strides = [1, 1]} : vector<8x512xf32> to vector<8x128xf32>
    %195 = vector.extract_strided_slice %192 {offsets = [0, 256], sizes = [8, 128], strides = [1, 1]} : vector<8x512xf32> to vector<8x128xf32>
    %196 = vector.extract_strided_slice %192 {offsets = [0, 384], sizes = [8, 128], strides = [1, 1]} : vector<8x512xf32> to vector<8x128xf32>
    %cst_52 = arith.constant 2.000000e+00 : f32
    %197 = vector.broadcast %cst_52 : f32 to vector<8x128xf32>
    %198 = arith.mulf %197, %196 : vector<8x128xf32>
    %cst_53 = arith.constant 1.000000e+00 : f32
    %199 = vector.broadcast %cst_53 : f32 to vector<8x128xf32>
    %200 = arith.subf %198, %199 : vector<8x128xf32>
    %201 = arith.mulf %194, %178 : vector<8x128xf32>
    %202 = arith.mulf %193, %200 : vector<8x128xf32>
    %203 = arith.addf %201, %202 : vector<8x128xf32>
    %204 = math.tanh %203 : vector<8x128xf32>
    %205 = arith.mulf %195, %204 : vector<8x128xf32>
    %206 = arith.truncf %205 : vector<8x128xf32> to vector<8x128xbf16>
    %c8_i32 = arith.constant 8 : i32
    %c0_54 = arith.constant 0 : index
    %c0_55 = arith.constant 0 : index
    %207 = vector.load %arg7[%c0_54, %c0_55] : memref<8x128xf32, #tpu.memory_space<vmem>>, vector<8x128xf32>
    tpu.vector_store %arg7[%c0_54, %c0_55], %205 {strides = array<i32>} : memref<8x128xf32, #tpu.memory_space<vmem>>, vector<8x128xf32>,
    %c0_56 = arith.constant 0 : index
    %c0_57 = arith.constant 0 : index
    %208 = vector.load %arg8[%c0_56, %c0_57] : memref<8x128xf32, #tpu.memory_space<vmem>>, vector<8x128xf32>
    tpu.vector_store %arg8[%c0_56, %c0_57], %203 {strides = array<i32>} : memref<8x128xf32, #tpu.memory_space<vmem>>, vector<8x128xf32>,
    %c0_i32_58 = arith.constant 0 : i32
    %209 = arith.cmpi eq, %arg1, %c0_i32_58 : i32
    %210 = arith.extui %209 : i1 to i32
    %c0_i32_59 = arith.constant 0 : i32
    %211 = arith.cmpi ne, %210, %c0_i32_59 : i32
    scf.if %211 {
      %c0_60 = arith.constant 0 : index
      %c0_61 = arith.constant 0 : index
      %212 = vector.load %arg7[%c0_60, %c0_61] : memref<8x128xf32, #tpu.memory_space<vmem>>, vector<8x128xf32>
      %213 = arith.truncf %212 : vector<8x128xf32> to vector<8x128xbf16>
      %c0_62 = arith.constant 0 : index
      %c0_63 = arith.constant 0 : index
      %214 = vector.load %arg4[%c0_62, %c0_63] : memref<128x128xbf16, #tpu.memory_space<vmem>>, vector<128x128xbf16>
      %cst_64 = arith.constant dense<0.000000e+00> : vector<8x128xf32>
      %215 = tpu.matmul %213, %214, %cst_64 {dimension_numbers = #tpu.dot_dimension_numbers<[1], [0], [0], [1], [0, 0, 1, 1], [], []>} : vector<8x128xbf16>, vector<128x128xbf16>, vector<8x128xf32> -> vector<8x128xf32>
      %c0_65 = arith.constant 0 : index
      %c0_66 = arith.constant 0 : index
      %216 = vector.load %arg5[%c0_65, %c0_66] : memref<1x128xf32, #tpu.memory_space<vmem>>, vector<1x128xf32>
      %217 = vector.broadcast %216 : vector<1x128xf32> to vector<8x128xf32>
      %218 = arith.addf %215, %217 : vector<8x128xf32>
      %219 = arith.negf %218 : vector<8x128xf32>
      %220 = math.exp %219 : vector<8x128xf32>
      %cst_67 = arith.constant 1.000000e+00 : f32
      %221 = vector.broadcast %cst_67 : f32 to vector<8x128xf32>
      %222 = arith.addf %221, %220 : vector<8x128xf32>
      %223 = arith.divf %221, %222 : vector<8x128xf32>
      %c0_68 = arith.constant 0 : index
      %c0_69 = arith.constant 0 : index
      %224 = vector.load %arg6[%c0_68, %c0_69] : memref<8x128xf32, #tpu.memory_space<vmem>>, vector<8x128xf32>
      tpu.vector_store %arg6[%c0_68, %c0_69], %223 {strides = array<i32>} : memref<8x128xf32, #tpu.memory_space<vmem>>, vector<8x128xf32>,
    } else {
    }
    return
  }
  func.func @transform_0(%arg0: i32, %arg1: i32) -> (i32, i32, i32) {
    %c0_i32 = arith.constant 0 : i32
    %c0_i32_0 = arith.constant 0 : i32
    return %arg1, %arg0, %c0_i32 : i32, i32, i32
  }
  func.func @transform_1(%arg0: i32, %arg1: i32) -> (i32, i32) {
    %c0_i32 = arith.constant 0 : i32
    %c0_i32_0 = arith.constant 0 : i32
    %c0_i32_1 = arith.constant 0 : i32
    return %c0_i32, %c0_i32_0 : i32, i32
  }
  func.func @transform_2(%arg0: i32, %arg1: i32) -> (i32, i32) {
    %c0_i32 = arith.constant 0 : i32
    %c0_i32_0 = arith.constant 0 : i32
    %c0_i32_1 = arith.constant 0 : i32
    return %c0_i32, %c0_i32_0 : i32, i32
  }
  func.func @transform_3(%arg0: i32, %arg1: i32) -> (i32, i32) {
    %c0_i32 = arith.constant 0 : i32
    %c0_i32_0 = arith.constant 0 : i32
    %c0_i32_1 = arith.constant 0 : i32
    return %c0_i32, %c0_i32_0 : i32, i32
  }
  func.func @transform_4(%arg0: i32, %arg1: i32) -> (i32, i32) {
    %c0_i32 = arith.constant 0 : i32
    %c0_i32_0 = arith.constant 0 : i32
    return %arg0, %c0_i32 : i32, i32
  }
}

</mosaic_0001>

<llo_original>
// kernel: tpu_custom_call.1
$region0: #{tpu_custom_call.1}
  #allocation0 [shape = 'u32[]', space=smem, size = 0x4, offset = 0x4, fixed_abs, tag = 'smem constant byte address 0x4 - core index']
  #allocation1 [shape = 'u32[144,128]{1,0:T(1,128)}', space=vmem, size = 0x12000, scoped, tag = 'internal scratch']
  #allocation2 [shape = 'f32[8,128]{1,0:T(8,128)}', space=vmem, size = 0x1000, scoped, tag = 'scratch operand']
  #allocation3 [shape = 'f32[8,128]{1,0:T(8,128)}', space=vmem, size = 0x1000, scoped, tag = 'scratch operand']
  %s0 = inlined_call_operand.hbm [shape: bf16[8,8,512], index: 0, kind: input, shape index: {}]
  %s1 = inlined_call_operand.hbm [shape: bf16[128,512], index: 1, kind: input, shape index: {}]
  %s2 = inlined_call_operand.hbm [shape: bf16[128,128], index: 2, kind: input, shape index: {}]
  %s3 = inlined_call_operand.vmem [shape: f32[1,128], index: 3, kind: input, shape index: {}]
  %s4 = inlined_call_operand.hbm [shape: f32[8,128], index: 4, kind: output, shape index: {}]
  %s5 = sld [smem:[#allocation0]]
  $region46: #{tpu_custom_call.1} parent=0
    _
  %s7 = ssub.s32 1, %s5
  %s8 = scalar_select 0, %s7, %s5
  $region1: #{tpu_custom_call.1} parent=0
    #allocation4 [shape = 'u8[65536]{0}', space=vmem, size = 0x10000, scoped, tag = 'input window, operand 0, single buffered']
    #allocation5 [shape = 's32[1]{0}', space=sflag, size = 0x4, scoped, tag = 'scoped memory for tpu_custom_call.1']
    #allocation6 [shape = 's32[1]{0}', space=sflag, size = 0x4, scoped, tag = 'scoped memory for tpu_custom_call.1']
    #allocation7 [shape = 'u8[131072]{0}', space=vmem, size = 0x20000, scoped, tag = 'input window, operand 1, single buffered']
    #allocation8 [shape = 's32[1]{0}', space=sflag, size = 0x4, scoped, tag = 'scoped memory for tpu_custom_call.1']
    #allocation9 [shape = 'u8[32768]{0}', space=vmem, size = 0x8000, scoped, tag = 'input window, operand 2, single buffered']
    #allocation10 [shape = 'u8[4096]{0}', space=vmem, size = 0x1000, scoped, tag = 'output window, operand 0, single buffered']
    %9 = vsyncpa [#allocation5], 0
    %10 = vsyncpa [#allocation8], 0
    %11 = vsyncpa [#allocation6], 0
    // Predicated region
    $region2: #{tpu_custom_call.1} parent=1 // pred_check
      _
    $region3: #{tpu_custom_call.1} parent=1 // pred_check_branch
      %13 = sbr.rel (0) target = $region5
    $region4: #{tpu_custom_call.1} parent=1 // pred_region
      %s15 = ssub.s32 2048, 2048
      %16 = vsyncadd [#allocation5], %s15
      %s17 = sshll.u32 [#allocation4], 4
      %s18 = int_to_ptr.vmem [resolvable:$true] %s17
      %23 = dma.hbm_to_vmem [thread:$0]  %s0, 2048, %s18, [#allocation5], 256, 256, 16
    $region5: #{tpu_custom_call.1} parent=1 // pred_fallthru
      _
    // Predicated region
    $region6: #{tpu_custom_call.1} parent=1 // pred_check
      _
    $region7: #{tpu_custom_call.1} parent=1 // pred_check_branch
      %25 = sbr.rel (0) target = $region9
    $region8: #{tpu_custom_call.1} parent=1 // pred_region
      %s27 = ssub.s32 4096, 4096
      %28 = vsyncadd [#allocation8], %s27
      %s29 = sshll.u32 [#allocation7], 4
      %s30 = int_to_ptr.vmem [resolvable:$true] %s29
      %35 = dma.hbm_to_vmem [thread:$0]  %s1, 4096, %s30, [#allocation8], 256, 256, 16
    $region9: #{tpu_custom_call.1} parent=1 // pred_fallthru
      _
    // Predicated region
    $region10: #{tpu_custom_call.1} parent=1 // pred_check
      _
    $region11: #{tpu_custom_call.1} parent=1 // pred_check_branch
      %37 = sbr.rel (0) target = $region13
    $region12: #{tpu_custom_call.1} parent=1 // pred_region
      %s39 = ssub.s32 1024, 1024
      %40 = vsyncadd [#allocation8], %s39
      %s41 = sshll.u32 [#allocation9], 4
      %s42 = int_to_ptr.vmem [resolvable:$true] %s41
      %47 = dma.hbm_to_vmem [thread:$0]  %s2, 1024, %s42, [#allocation8], 64, 64, 4
    $region13: #{tpu_custom_call.1} parent=1 // pred_fallthru
      _
    // Predicated region
    $region14: #{tpu_custom_call.1} parent=1 // pred_check
      _
    $region15: #{tpu_custom_call.1} parent=1 // pred_check_branch
      %49 = sbr.rel (0) target = $region17
    $region16: #{tpu_custom_call.1} parent=1 // pred_region
      _
    $region17: #{tpu_custom_call.1} parent=1 // pred_fallthru
      _
    // Predicated region
    $region18: #{tpu_custom_call.1} parent=1 // pred_check
      _
    $region19: #{tpu_custom_call.1} parent=1 // pred_check_branch
      %51 = sbr.rel (0) target = $region21
    $region20: #{tpu_custom_call.1} parent=1 // pred_region
      %52 = dma.done [#allocation5], 2048
    $region21: #{tpu_custom_call.1} parent=1 // pred_fallthru
      _
    // Predicated region
    $region22: #{tpu_custom_call.1} parent=1 // pred_check
      _
    $region23: #{tpu_custom_call.1} parent=1 // pred_check_branch
      %54 = sbr.rel (0) target = $region25
    $region24: #{tpu_custom_call.1} parent=1 // pred_region
      %55 = dma.done [#allocation8], 4096
    $region25: #{tpu_custom_call.1} parent=1 // pred_fallthru
      _
    // Predicated region
    $region26: #{tpu_custom_call.1} parent=1 // pred_check
      _
    $region27: #{tpu_custom_call.1} parent=1 // pred_check_branch
      %57 = sbr.rel (0) target = $region29
    $region28: #{tpu_custom_call.1} parent=1 // pred_region
      %58 = dma.done [#allocation8], 1024
    $region29: #{tpu_custom_call.1} parent=1 // pred_fallthru
      _
    %p60 = scmp.eq.s32.totalorder 0, 0
    // Predicated region
    $region30: #{tpu_custom_call.1} parent=1 // pred_check
      %p61 = pneg %p60
    $region31: #{tpu_custom_call.1} parent=1 // pred_check_branch
      %63 = sbr.rel (%p61) target = $region33
    $region32: #{tpu_custom_call.1} parent=1 // pred_region
      %64 = vst [vmem:[#allocation2] sm:$0xff] 0.0
      %65 = vst [vmem:[#allocation3] sm:$0xff] 0.0
    $region33: #{tpu_custom_call.1} parent=1 // pred_fallthru
      _
    %v66 = vld [vmem:[#allocation7] sm:$0xff]
    %v67 = vld [vmem:[#allocation7 + $0x8] sm:$0xff]
    %v68 = vld [vmem:[#allocation7 + $0x10] sm:$0xff]
    %v69 = vld [vmem:[#allocation7 + $0x18] sm:$0xff]
    %v70 = vld [vmem:[#allocation7 + $0x20] sm:$0xff]
    %v71 = vld [vmem:[#allocation7 + $0x28] sm:$0xff]
    %v72 = vld [vmem:[#allocation7 + $0x30] sm:$0xff]
    %v73 = vld [vmem:[#allocation7 + $0x38] sm:$0xff]
    %v74 = vld [vmem:[#allocation7 + $0x40] sm:$0xff]
    %v75 = vld [vmem:[#allocation7 + $0x48] sm:$0xff]
    %v76 = vld [vmem:[#allocation7 + $0x50] sm:$0xff]
    %v77 = vld [vmem:[#allocation7 + $0x58] sm:$0xff]
    %v78 = vld [vmem:[#allocation7 + $0x60] sm:$0xff]
    %v79 = vld [vmem:[#allocation7 + $0x68] sm:$0xff]
    %v80 = vld [vmem:[#allocation7 + $0x70] sm:$0xff]
    %v81 = vld [vmem:[#allocation7 + $0x78] sm:$0xff]
    %v82 = vld [vmem:[#allocation7 + $0x80] sm:$0xff]
    %v83 = vld [vmem:[#allocation7 + $0x88] sm:$0xff]
    %v84 = vld [vmem:[#allocation7 + $0x90] sm:$0xff]
    %v85 = vld [vmem:[#allocation7 + $0x98] sm:$0xff]
    %v86 = vld [vmem:[#allocation7 + $0xa0] sm:$0xff]
    %v87 = vld [vmem:[#allocation7 + $0xa8] sm:$0xff]
    %v88 = vld [vmem:[#allocation7 + $0xb0] sm:$0xff]
    %v89 = vld [vmem:[#allocation7 + $0xb8] sm:$0xff]
    %v90 = vld [vmem:[#allocation7 + $0xc0] sm:$0xff]
    %v91 = vld [vmem:[#allocation7 + $0xc8] sm:$0xff]
    %v92 = vld [vmem:[#allocation7 + $0xd0] sm:$0xff]
    %v93 = vld [vmem:[#allocation7 + $0xd8] sm:$0xff]
    %v94 = vld [vmem:[#allocation7 + $0xe0] sm:$0xff]
    %v95 = vld [vmem:[#allocation7 + $0xe8] sm:$0xff]
    %v96 = vld [vmem:[#allocation7 + $0xf0] sm:$0xff]
    %v97 = vld [vmem:[#allocation7 + $0xf8] sm:$0xff]
    %v98 = vld [vmem:[#allocation2] sm:$0xff]
    %v99 = vld [vmem:[#allocation3] sm:$0xff]
    %v100 = vpack.c.bf16 %v98, %v98
    %v101 = vld [vmem:[#allocation4] sm:$0xff]
    %v102 = vld [vmem:[#allocation4 + $0x8] sm:$0xff]
    %v103 = vunpack.c.l.bf16 %v101
    %v104 = vunpack.c.h.bf16 %v101
    %v105 = vunpack.c.l.bf16 %v102
    %v106 = vunpack.c.h.bf16 %v102
    %v139 = vunpack.c.l.b16 %v66
    %v140 = vunpack.c.h.b16 %v66
    %v141 = vunpack.c.l.b16 %v67
    %v142 = vunpack.c.h.b16 %v67
    %v143 = vunpack.c.l.b16 %v68
    %v144 = vunpack.c.h.b16 %v68
    %v145 = vunpack.c.l.b16 %v69
    %v146 = vunpack.c.h.b16 %v69
    %v147 = vunpack.c.l.b16 %v70
    %v148 = vunpack.c.h.b16 %v70
    %v149 = vunpack.c.l.b16 %v71
    %v150 = vunpack.c.h.b16 %v71
    %v151 = vunpack.c.l.b16 %v72
    %v152 = vunpack.c.h.b16 %v72
    %v153 = vunpack.c.l.b16 %v73
    %v154 = vunpack.c.h.b16 %v73
    %v155 = vunpack.c.l.b16 %v74
    %v156 = vunpack.c.h.b16 %v74
    %v157 = vunpack.c.l.b16 %v75
    %v158 = vunpack.c.h.b16 %v75
    %v159 = vunpack.c.l.b16 %v76
    %v160 = vunpack.c.h.b16 %v76
    %v161 = vunpack.c.l.b16 %v77
    %v162 = vunpack.c.h.b16 %v77
    %v163 = vunpack.c.l.b16 %v78
    %v164 = vunpack.c.h.b16 %v78
    %v165 = vunpack.c.l.b16 %v79
    %v166 = vunpack.c.h.b16 %v79
    %v167 = vunpack.c.l.b16 %v80
    %v168 = vunpack.c.h.b16 %v80
    %v169 = vunpack.c.l.b16 %v81
    %v170 = vunpack.c.h.b16 %v81
    %v171 = vunpack.c.l.b16 %v82
    %v172 = vunpack.c.h.b16 %v82
    %v173 = vunpack.c.l.b16 %v83
    %v174 = vunpack.c.h.b16 %v83
    %v175 = vunpack.c.l.b16 %v84
    %v176 = vunpack.c.h.b16 %v84
    %v177 = vunpack.c.l.b16 %v85
    %v178 = vunpack.c.h.b16 %v85
    %v179 = vunpack.c.l.b16 %v86
    %v180 = vunpack.c.h.b16 %v86
    %v181 = vunpack.c.l.b16 %v87
    %v182 = vunpack.c.h.b16 %v87
    %v183 = vunpack.c.l.b16 %v88
    %v184 = vunpack.c.h.b16 %v88
    %v185 = vunpack.c.l.b16 %v89
    %v186 = vunpack.c.h.b16 %v89
    %v187 = vunpack.c.l.b16 %v90
    %v188 = vunpack.c.h.b16 %v90
    %v189 = vunpack.c.l.b16 %v91
    %v190 = vunpack.c.h.b16 %v91
    %v191 = vunpack.c.l.b16 %v92
    %v192 = vunpack.c.h.b16 %v92
    %v193 = vunpack.c.l.b16 %v93
    %v194 = vunpack.c.h.b16 %v93
    %v195 = vunpack.c.l.b16 %v94
    %v196 = vunpack.c.h.b16 %v94
    %v197 = vunpack.c.l.b16 %v95
    %v198 = vunpack.c.h.b16 %v95
    %v199 = vunpack.c.l.b16 %v96
    %v200 = vunpack.c.h.b16 %v96
    %v201 = vunpack.c.l.b16 %v97
    %v202 = vunpack.c.h.b16 %v97
    %v203 = vpack.c.b16 %v143, %v139
    %v204 = vpack.c.b16 %v144, %v140
    %v205 = vpack.c.b16 %v145, %v141
    %v206 = vpack.c.b16 %v146, %v142
    %v207 = vpack.c.b16 %v151, %v147
    %v208 = vpack.c.b16 %v152, %v148
    %v209 = vpack.c.b16 %v153, %v149
    %v210 = vpack.c.b16 %v154, %v150
    %v211 = vpack.c.b16 %v159, %v155
    %v212 = vpack.c.b16 %v160, %v156
    %v213 = vpack.c.b16 %v161, %v157
    %v214 = vpack.c.b16 %v162, %v158
    %v215 = vpack.c.b16 %v167, %v163
    %v216 = vpack.c.b16 %v168, %v164
    %v217 = vpack.c.b16 %v169, %v165
    %v218 = vpack.c.b16 %v170, %v166
    %v219 = vpack.c.b16 %v175, %v171
    %v220 = vpack.c.b16 %v176, %v172
    %v221 = vpack.c.b16 %v177, %v173
    %v222 = vpack.c.b16 %v178, %v174
    %v223 = vpack.c.b16 %v183, %v179
    %v224 = vpack.c.b16 %v184, %v180
    %v225 = vpack.c.b16 %v185, %v181
    %v226 = vpack.c.b16 %v186, %v182
    %v227 = vpack.c.b16 %v191, %v187
    %v228 = vpack.c.b16 %v192, %v188
    %v229 = vpack.c.b16 %v193, %v189
    %v230 = vpack.c.b16 %v194, %v190
    %v231 = vpack.c.b16 %v199, %v195
    %v232 = vpack.c.b16 %v200, %v196
    %v233 = vpack.c.b16 %v201, %v197
    %v234 = vpack.c.b16 %v202, %v198
    %267 = vmatprep.subr.bf16.mxu0 %v204
    %268 = vmatpush1.bf16.msra.mxu0 %v203
    %269 = vmatprep.subr.bf16.mxu0 %v208
    %270 = vmatpush1.bf16.msra.mxu0 %v207
    %271 = vmatprep.subr.bf16.mxu0 %v212
    %272 = vmatpush1.bf16.msra.mxu0 %v211
    %273 = vmatprep.subr.bf16.mxu0 %v216
    %274 = vmatpush1.bf16.msra.mxu0 %v215
    %275 = vmatprep.subr.bf16.mxu0 %v220
    %276 = vmatpush1.bf16.msra.mxu0 %v219
    %277 = vmatprep.subr.bf16.mxu0 %v224
    %278 = vmatpush1.bf16.msra.mxu0 %v223
    %279 = vmatprep.subr.bf16.mxu0 %v228
    %280 = vmatpush1.bf16.msra.mxu0 %v227
    %281 = vmatprep.subr.bf16.mxu0 %v232
    %282 = vmatpush1.bf16.msra.mxu0 %v231
    %283 = vmatprep.subr.bf16.mxu0 0
    %284 = vmatpush1.bf16.msra.mxu0 0
    %285 = vmatprep.subr.bf16.mxu0 0
    %286 = vmatpush1.bf16.msra.mxu0 0
    %287 = vmatprep.subr.bf16.mxu0 0
    %288 = vmatpush1.bf16.msra.mxu0 0
    %289 = vmatprep.subr.bf16.mxu0 0
    %290 = vmatpush1.bf16.msra.mxu0 0
    %291 = vmatprep.subr.bf16.mxu0 0
    %292 = vmatpush1.bf16.msra.mxu0 0
    %293 = vmatprep.subr.bf16.mxu0 0
    %294 = vmatpush1.bf16.msra.mxu0 0
    %295 = vmatprep.subr.bf16.mxu0 0
    %296 = vmatpush1.bf16.msra.mxu0 0
    %297 = vmatprep.subr.bf16.mxu0 0
    %298 = vmatpush1.bf16.msra.mxu0 0
    %299 = vmatprep.mubr.bf16.mxu0 0
    %300 = vmatmul.mubr.bf16.gmra.mrb[0].mxu0 %v100
    %v301 = vpop.f32.mrb[0].mxu0
    %v302 = vadd.f32 0.0, %v301
    %v303 = vpop.f32.mrb[0].mxu0
    %v304 = vadd.f32 0.0, %v303
    %v305 = vpop.f32.mrb[0].mxu0
    %v306 = vpop.f32.mrb[0].mxu0
    %307 = vdwg.mxu0
    %308 = vmatprep.subr.bf16.mxu0 %v206
    %309 = vmatpush1.bf16.msra.mxu0 %v205
    %310 = vmatprep.subr.bf16.mxu0 %v210
    %311 = vmatpush1.bf16.msra.mxu0 %v209
    %312 = vmatprep.subr.bf16.mxu0 %v214
    %313 = vmatpush1.bf16.msra.mxu0 %v213
    %314 = vmatprep.subr.bf16.mxu0 %v218
    %315 = vmatpush1.bf16.msra.mxu0 %v217
    %316 = vmatprep.subr.bf16.mxu0 %v222
    %317 = vmatpush1.bf16.msra.mxu0 %v221
    %318 = vmatprep.subr.bf16.mxu0 %v226
    %319 = vmatpush1.bf16.msra.mxu0 %v225
    %320 = vmatprep.subr.bf16.mxu0 %v230
    %321 = vmatpush1.bf16.msra.mxu0 %v229
    %322 = vmatprep.subr.bf16.mxu0 %v234
    %323 = vmatpush1.bf16.msra.mxu0 %v233
    %324 = vmatprep.subr.bf16.mxu0 0
    %325 = vmatpush1.bf16.msra.mxu0 0
    %326 = vmatprep.subr.bf16.mxu0 0
    %327 = vmatpush1.bf16.msra.mxu0 0
    %328 = vmatprep.subr.bf16.mxu0 0
    %329 = vmatpush1.bf16.msra.mxu0 0
    %330 = vmatprep.subr.bf16.mxu0 0
    %331 = vmatpush1.bf16.msra.mxu0 0
    %332 = vmatprep.subr.bf16.mxu0 0
    %333 = vmatpush1.bf16.msra.mxu0 0
    %334 = vmatprep.subr.bf16.mxu0 0
    %335 = vmatpush1.bf16.msra.mxu0 0
    %336 = vmatprep.subr.bf16.mxu0 0
    %337 = vmatpush1.bf16.msra.mxu0 0
    %338 = vmatprep.subr.bf16.mxu0 0
    %339 = vmatpush1.bf16.msra.mxu0 0
    %340 = vmatprep.mubr.bf16.mxu0 0
    %341 = vmatmul.mubr.bf16.gmra.mrb[0].mxu0 %v100
    %v342 = vpop.f32.mrb[0].mxu0
    %v343 = vadd.f32 0.0, %v342
    %v344 = vpop.f32.mrb[0].mxu0
    %v345 = vadd.f32 0.0, %v344
    %v346 = vpop.f32.mrb[0].mxu0
    %v347 = vpop.f32.mrb[0].mxu0
    %348 = vdwg.mxu0
    %v349 = vadd.f32 %v103, %v302
    %v350 = vadd.f32 %v104, %v304
    %v351 = vadd.f32 %v105, %v343
    %v352 = vadd.f32 %v106, %v345
    %v353 = vxor.u32 %v349, 2147483648
    %v354 = vxor.u32 %v350, 2147483648
    %v355 = vxor.u32 %v351, 2147483648
    %v356 = vxor.u32 %v352, 2147483648
    %v357 = vmul.f32 %v353, 1.442695
    %v358 = vpow.pop %v357
    %v359 = vmul.f32 %v354, 1.442695
    %v360 = vpow.pop %v359
    %v361 = vmul.f32 %v355, 1.442695
    %v362 = vpow.pop %v361
    %v363 = vmul.f32 %v356, 1.442695
    %v364 = vpow.pop %v363
    %v365 = vadd.f32 %v358, 1.0
    %v366 = vadd.f32 %v360, 1.0
    %v367 = vadd.f32 %v362, 1.0
    %v368 = vadd.f32 %v364, 1.0
    %v369 = vrcp.pop %v365
    %v370 = vmul.f32 1.0, %v369
    %v371 = vrcp.pop %v366
    %v372 = vmul.f32 1.0, %v371
    %v373 = vrcp.pop %v367
    %v374 = vmul.f32 1.0, %v373
    %v375 = vrcp.pop %v368
    %v376 = vmul.f32 1.0, %v375
    %v377 = vmul.f32 %v376, 2.0
    %v378 = vsub.f32 %v377, 1.0
    %v379 = vmul.f32 %v372, %v99
    %v380 = vmul.f32 %v370, %v378
    %v381 = vadd.f32 %v379, %v380
    %v382 = vtanh.pop %v381
    %v383 = vmul.f32 %v374, %v382
    %v384 = vpack.c.bf16 %v383, %v383
    %s385 = scalar_lea.vmem [#allocation4], 16
    %v386 = vld [vmem:[%s385] sm:$0xff]
    %v387 = vld [vmem:[%s385 + $0x8] sm:$0xff]
    %v388 = vunpack.c.l.bf16 %v386
    %v389 = vunpack.c.h.bf16 %v386
    %v390 = vunpack.c.l.bf16 %v387
    %v391 = vunpack.c.h.bf16 %v387
    %392 = vmatprep.subr.bf16.mxu0 %v204
    %393 = vmatpush1.bf16.msra.mxu0 %v203
    %394 = vmatprep.subr.bf16.mxu0 %v208
    %395 = vmatpush1.bf16.msra.mxu0 %v207
    %396 = vmatprep.subr.bf16.mxu0 %v212
    %397 = vmatpush1.bf16.msra.mxu0 %v211
    %398 = vmatprep.subr.bf16.mxu0 %v216
    %399 = vmatpush1.bf16.msra.mxu0 %v215
    %400 = vmatprep.subr.bf16.mxu0 %v220
    %401 = vmatpush1.bf16.msra.mxu0 %v219
    %402 = vmatprep.subr.bf16.mxu0 %v224
    %403 = vmatpush1.bf16.msra.mxu0 %v223
    %404 = vmatprep.subr.bf16.mxu0 %v228
    %405 = vmatpush1.bf16.msra.mxu0 %v227
    %406 = vmatprep.subr.bf16.mxu0 %v232
    %407 = vmatpush1.bf16.msra.mxu0 %v231
    %408 = vmatprep.subr.bf16.mxu0 0
    %409 = vmatpush1.bf16.msra.mxu0 0
    %410 = vmatprep.subr.bf16.mxu0 0
    %411 = vmatpush1.bf16.msra.mxu0 0
    %412 = vmatprep.subr.bf16.mxu0 0
    %413 = vmatpush1.bf16.msra.mxu0 0
    %414 = vmatprep.subr.bf16.mxu0 0
    %415 = vmatpush1.bf16.msra.mxu0 0
    %416 = vmatprep.subr.bf16.mxu0 0
    %417 = vmatpush1.bf16.msra.mxu0 0
    %418 = vmatprep.subr.bf16.mxu0 0
    %419 = vmatpush1.bf16.msra.mxu0 0
    %420 = vmatprep.subr.bf16.mxu0 0
    %421 = vmatpush1.bf16.msra.mxu0 0
    %422 = vmatprep.subr.bf16.mxu0 0
    %423 = vmatpush1.bf16.msra.mxu0 0
    %424 = vmatprep.mubr.bf16.mxu0 0
    %425 = vmatmul.mubr.bf16.gmra.mrb[0].mxu0 %v384
    %v426 = vpop.f32.mrb[0].mxu0
    %v427 = vadd.f32 0.0, %v426
    %v428 = vpop.f32.mrb[0].mxu0
    %v429 = vadd.f32 0.0, %v428
    %v430 = vpop.f32.mrb[0].mxu0
    %v431 = vpop.f32.mrb[0].mxu0
    %432 = vdwg.mxu0
    %433 = vmatprep.subr.bf16.mxu0 %v206
    %434 = vmatpush1.bf16.msra.mxu0 %v205
    %435 = vmatprep.subr.bf16.mxu0 %v210
    %436 = vmatpush1.bf16.msra.mxu0 %v209
    %437 = vmatprep.subr.bf16.mxu0 %v214
    %438 = vmatpush1.bf16.msra.mxu0 %v213
    %439 = vmatprep.subr.bf16.mxu0 %v218
    %440 = vmatpush1.bf16.msra.mxu0 %v217
    %441 = vmatprep.subr.bf16.mxu0 %v222
    %442 = vmatpush1.bf16.msra.mxu0 %v221
    %443 = vmatprep.subr.bf16.mxu0 %v226
    %444 = vmatpush1.bf16.msra.mxu0 %v225
    %445 = vmatprep.subr.bf16.mxu0 %v230
    %446 = vmatpush1.bf16.msra.mxu0 %v229
    %447 = vmatprep.subr.bf16.mxu0 %v234
    %448 = vmatpush1.bf16.msra.mxu0 %v233
    %449 = vmatprep.subr.bf16.mxu0 0
    %450 = vmatpush1.bf16.msra.mxu0 0
    %451 = vmatprep.subr.bf16.mxu0 0
    %452 = vmatpush1.bf16.msra.mxu0 0
    %453 = vmatprep.subr.bf16.mxu0 0
    %454 = vmatpush1.bf16.msra.mxu0 0
    %455 = vmatprep.subr.bf16.mxu0 0
    %456 = vmatpush1.bf16.msra.mxu0 0
    %457 = vmatprep.subr.bf16.mxu0 0
    %458 = vmatpush1.bf16.msra.mxu0 0
    %459 = vmatprep.subr.bf16.mxu0 0
    %460 = vmatpush1.bf16.msra.mxu0 0
    %461 = vmatprep.subr.bf16.mxu0 0
    %462 = vmatpush1.bf16.msra.mxu0 0
    %463 = vmatprep.subr.bf16.mxu0 0
    %464 = vmatpush1.bf16.msra.mxu0 0
    %465 = vmatprep.mubr.bf16.mxu0 0
    %466 = vmatmul.mubr.bf16.gmra.mrb[0].mxu0 %v384
    %v467 = vpop.f32.mrb[0].mxu0
    %v468 = vadd.f32 0.0, %v467
    %v469 = vpop.f32.mrb[0].mxu0
    %v470 = vadd.f32 0.0, %v469
    %v471 = vpop.f32.mrb[0].mxu0
    %v472 = vpop.f32.mrb[0].mxu0
    %473 = vdwg.mxu0
    %v474 = vadd.f32 %v388, %v427
    %v475 = vadd.f32 %v389, %v429
    %v476 = vadd.f32 %v390, %v468
    %v477 = vadd.f32 %v391, %v470
    %v478 = vxor.u32 %v474, 2147483648
    %v479 = vxor.u32 %v475, 2147483648
    %v480 = vxor.u32 %v476, 2147483648
    %v481 = vxor.u32 %v477, 2147483648
    %v482 = vmul.f32 %v478, 1.442695
    %v483 = vpow.pop %v482
    %v484 = vmul.f32 %v479, 1.442695
    %v485 = vpow.pop %v484
    %v486 = vmul.f32 %v480, 1.442695
    %v487 = vpow.pop %v486
    %v488 = vmul.f32 %v481, 1.442695
    %v489 = vpow.pop %v488
    %v490 = vadd.f32 %v483, 1.0
    %v491 = vadd.f32 %v485, 1.0
    %v492 = vadd.f32 %v487, 1.0
    %v493 = vadd.f32 %v489, 1.0
    %v494 = vrcp.pop %v490
    %v495 = vmul.f32 1.0, %v494
    %v496 = vrcp.pop %v491
    %v497 = vmul.f32 1.0, %v496
    %v498 = vrcp.pop %v492
    %v499 = vmul.f32 1.0, %v498
    %v500 = vrcp.pop %v493
    %v501 = vmul.f32 1.0, %v500
    %v502 = vmul.f32 %v501, 2.0
    %v503 = vsub.f32 %v502, 1.0
    %v504 = vmul.f32 %v497, %v381
    %v505 = vmul.f32 %v495, %v503
    %v506 = vadd.f32 %v504, %v505
    %v507 = vtanh.pop %v506
    %v508 = vmul.f32 %v499, %v507
    %v509 = vpack.c.bf16 %v508, %v508
    %s510 = scalar_lea.vmem [#allocation4], 32
    %v511 = vld [vmem:[%s510] sm:$0xff]
    %v512 = vld [vmem:[%s510 + $0x8] sm:$0xff]
    %v513 = vunpack.c.l.bf16 %v511
    %v514 = vunpack.c.h.bf16 %v511
    %v515 = vunpack.c.l.bf16 %v512
    %v516 = vunpack.c.h.bf16 %v512
    %517 = vmatprep.subr.bf16.mxu0 %v204
    %518 = vmatpush1.bf16.msra.mxu0 %v203
    %519 = vmatprep.subr.bf16.mxu0 %v208
    %520 = vmatpush1.bf16.msra.mxu0 %v207
    %521 = vmatprep.subr.bf16.mxu0 %v212
    %522 = vmatpush1.bf16.msra.mxu0 %v211
    %523 = vmatprep.subr.bf16.mxu0 %v216
    %524 = vmatpush1.bf16.msra.mxu0 %v215
    %525 = vmatprep.subr.bf16.mxu0 %v220
    %526 = vmatpush1.bf16.msra.mxu0 %v219
    %527 = vmatprep.subr.bf16.mxu0 %v224
    %528 = vmatpush1.bf16.msra.mxu0 %v223
    %529 = vmatprep.subr.bf16.mxu0 %v228
    %530 = vmatpush1.bf16.msra.mxu0 %v227
    %531 = vmatprep.subr.bf16.mxu0 %v232
    %532 = vmatpush1.bf16.msra.mxu0 %v231
    %533 = vmatprep.subr.bf16.mxu0 0
    %534 = vmatpush1.bf16.msra.mxu0 0
    %535 = vmatprep.subr.bf16.mxu0 0
    %536 = vmatpush1.bf16.msra.mxu0 0
    %537 = vmatprep.subr.bf16.mxu0 0
    %538 = vmatpush1.bf16.msra.mxu0 0
    %539 = vmatprep.subr.bf16.mxu0 0
    %540 = vmatpush1.bf16.msra.mxu0 0
    %541 = vmatprep.subr.bf16.mxu0 0
    %542 = vmatpush1.bf16.msra.mxu0 0
    %543 = vmatprep.subr.bf16.mxu0 0
    %544 = vmatpush1.bf16.msra.mxu0 0
    %545 = vmatprep.subr.bf16.mxu0 0
    %546 = vmatpush1.bf16.msra.mxu0 0
    %547 = vmatprep.subr.bf16.mxu0 0
    %548 = vmatpush1.bf16.msra.mxu0 0
    %549 = vmatprep.mubr.bf16.mxu0 0
    %550 = vmatmul.mubr.bf16.gmra.mrb[0].mxu0 %v509
    %v551 = vpop.f32.mrb[0].mxu0
    %v552 = vadd.f32 0.0, %v551
    %v553 = vpop.f32.mrb[0].mxu0
    %v554 = vadd.f32 0.0, %v553
    %v555 = vpop.f32.mrb[0].mxu0
    %v556 = vpop.f32.mrb[0].mxu0
    %557 = vdwg.mxu0
    %558 = vmatprep.subr.bf16.mxu0 %v206
    %559 = vmatpush1.bf16.msra.mxu0 %v205
    %560 = vmatprep.subr.bf16.mxu0 %v210
    %561 = vmatpush1.bf16.msra.mxu0 %v209
    %562 = vmatprep.subr.bf16.mxu0 %v214
    %563 = vmatpush1.bf16.msra.mxu0 %v213
    %564 = vmatprep.subr.bf16.mxu0 %v218
    %565 = vmatpush1.bf16.msra.mxu0 %v217
    %566 = vmatprep.subr.bf16.mxu0 %v222
    %567 = vmatpush1.bf16.msra.mxu0 %v221
    %568 = vmatprep.subr.bf16.mxu0 %v226
    %569 = vmatpush1.bf16.msra.mxu0 %v225
    %570 = vmatprep.subr.bf16.mxu0 %v230
    %571 = vmatpush1.bf16.msra.mxu0 %v229
    %572 = vmatprep.subr.bf16.mxu0 %v234
    %573 = vmatpush1.bf16.msra.mxu0 %v233
    %574 = vmatprep.subr.bf16.mxu0 0
    %575 = vmatpush1.bf16.msra.mxu0 0
    %576 = vmatprep.subr.bf16.mxu0 0
    %577 = vmatpush1.bf16.msra.mxu0 0
    %578 = vmatprep.subr.bf16.mxu0 0
    %579 = vmatpush1.bf16.msra.mxu0 0
    %580 = vmatprep.subr.bf16.mxu0 0
    %581 = vmatpush1.bf16.msra.mxu0 0
    %582 = vmatprep.subr.bf16.mxu0 0
    %583 = vmatpush1.bf16.msra.mxu0 0
    %584 = vmatprep.subr.bf16.mxu0 0
    %585 = vmatpush1.bf16.msra.mxu0 0
    %586 = vmatprep.subr.bf16.mxu0 0
    %587 = vmatpush1.bf16.msra.mxu0 0
    %588 = vmatprep.subr.bf16.mxu0 0
    %589 = vmatpush1.bf16.msra.mxu0 0
    %590 = vmatprep.mubr.bf16.mxu0 0
    %591 = vmatmul.mubr.bf16.gmra.mrb[0].mxu0 %v509
    %v592 = vpop.f32.mrb[0].mxu0
    %v593 = vadd.f32 0.0, %v592
    %v594 = vpop.f32.mrb[0].mxu0
    %v595 = vadd.f32 0.0, %v594
    %v596 = vpop.f32.mrb[0].mxu0
    %v597 = vpop.f32.mrb[0].mxu0
    %598 = vdwg.mxu0
    %v599 = vadd.f32 %v513, %v552
    %v600 = vadd.f32 %v514, %v554
    %v601 = vadd.f32 %v515, %v593
    %v602 = vadd.f32 %v516, %v595
    %v603 = vxor.u32 %v599, 2147483648
    %v604 = vxor.u32 %v600, 2147483648
    %v605 = vxor.u32 %v601, 2147483648
    %v606 = vxor.u32 %v602, 2147483648
    %v607 = vmul.f32 %v603, 1.442695
    %v608 = vpow.pop %v607
    %v609 = vmul.f32 %v604, 1.442695
    %v610 = vpow.pop %v609
    %v611 = vmul.f32 %v605, 1.442695
    %v612 = vpow.pop %v611
    %v613 = vmul.f32 %v606, 1.442695
    %v614 = vpow.pop %v613
    %v615 = vadd.f32 %v608, 1.0
    %v616 = vadd.f32 %v610, 1.0
    %v617 = vadd.f32 %v612, 1.0
    %v618 = vadd.f32 %v614, 1.0
    %v619 = vrcp.pop %v615
    %v620 = vmul.f32 1.0, %v619
    %v621 = vrcp.pop %v616
    %v622 = vmul.f32 1.0, %v621
    %v623 = vrcp.pop %v617
    %v624 = vmul.f32 1.0, %v623
    %v625 = vrcp.pop %v618
    %v626 = vmul.f32 1.0, %v625
    %v627 = vmul.f32 %v626, 2.0
    %v628 = vsub.f32 %v627, 1.0
    %v629 = vmul.f32 %v622, %v506
    %v630 = vmul.f32 %v620, %v628
    %v631 = vadd.f32 %v629, %v630
    %v632 = vtanh.pop %v631
    %v633 = vmul.f32 %v624, %v632
    %v634 = vpack.c.bf16 %v633, %v633
    %s635 = scalar_lea.vmem [#allocation4], 48
    %v636 = vld [vmem:[%s635] sm:$0xff]
    %v637 = vld [vmem:[%s635 + $0x8] sm:$0xff]
    %v638 = vunpack.c.l.bf16 %v636
    %v639 = vunpack.c.h.bf16 %v636
    %v640 = vunpack.c.l.bf16 %v637
    %v641 = vunpack.c.h.bf16 %v637
    %642 = vmatprep.subr.bf16.mxu0 %v204
    %643 = vmatpush1.bf16.msra.mxu0 %v203
    %644 = vmatprep.subr.bf16.mxu0 %v208
    %645 = vmatpush1.bf16.msra.mxu0 %v207
    %646 = vmatprep.subr.bf16.mxu0 %v212
    %647 = vmatpush1.bf16.msra.mxu0 %v211
    %648 = vmatprep.subr.bf16.mxu0 %v216
    %649 = vmatpush1.bf16.msra.mxu0 %v215
    %650 = vmatprep.subr.bf16.mxu0 %v220
    %651 = vmatpush1.bf16.msra.mxu0 %v219
    %652 = vmatprep.subr.bf16.mxu0 %v224
    %653 = vmatpush1.bf16.msra.mxu0 %v223
    %654 = vmatprep.subr.bf16.mxu0 %v228
    %655 = vmatpush1.bf16.msra.mxu0 %v227
    %656 = vmatprep.subr.bf16.mxu0 %v232
    %657 = vmatpush1.bf16.msra.mxu0 %v231
    %658 = vmatprep.subr.bf16.mxu0 0
    %659 = vmatpush1.bf16.msra.mxu0 0
    %660 = vmatprep.subr.bf16.mxu0 0
    %661 = vmatpush1.bf16.msra.mxu0 0
    %662 = vmatprep.subr.bf16.mxu0 0
    %663 = vmatpush1.bf16.msra.mxu0 0
    %664 = vmatprep.subr.bf16.mxu0 0
    %665 = vmatpush1.bf16.msra.mxu0 0
    %666 = vmatprep.subr.bf16.mxu0 0
    %667 = vmatpush1.bf16.msra.mxu0 0
    %668 = vmatprep.subr.bf16.mxu0 0
    %669 = vmatpush1.bf16.msra.mxu0 0
    %670 = vmatprep.subr.bf16.mxu0 0
    %671 = vmatpush1.bf16.msra.mxu0 0
    %672 = vmatprep.subr.bf16.mxu0 0
    %673 = vmatpush1.bf16.msra.mxu0 0
    %674 = vmatprep.mubr.bf16.mxu0 0
    %675 = vmatmul.mubr.bf16.gmra.mrb[0].mxu0 %v634
    %v676 = vpop.f32.mrb[0].mxu0
    %v677 = vadd.f32 0.0, %v676
    %v678 = vpop.f32.mrb[0].mxu0
    %v679 = vadd.f32 0.0, %v678
    %v680 = vpop.f32.mrb[0].mxu0
    %v681 = vpop.f32.mrb[0].mxu0
    %682 = vdwg.mxu0
    %683 = vmatprep.subr.bf16.mxu0 %v206
    %684 = vmatpush1.bf16.msra.mxu0 %v205
    %685 = vmatprep.subr.bf16.mxu0 %v210
    %686 = vmatpush1.bf16.msra.mxu0 %v209
    %687 = vmatprep.subr.bf16.mxu0 %v214
    %688 = vmatpush1.bf16.msra.mxu0 %v213
    %689 = vmatprep.subr.bf16.mxu0 %v218
    %690 = vmatpush1.bf16.msra.mxu0 %v217
    %691 = vmatprep.subr.bf16.mxu0 %v222
    %692 = vmatpush1.bf16.msra.mxu0 %v221
    %693 = vmatprep.subr.bf16.mxu0 %v226
    %694 = vmatpush1.bf16.msra.mxu0 %v225
    %695 = vmatprep.subr.bf16.mxu0 %v230
    %696 = vmatpush1.bf16.msra.mxu0 %v229
    %697 = vmatprep.subr.bf16.mxu0 %v234
    %698 = vmatpush1.bf16.msra.mxu0 %v233
    %699 = vmatprep.subr.bf16.mxu0 0
    %700 = vmatpush1.bf16.msra.mxu0 0
    %701 = vmatprep.subr.bf16.mxu0 0
    %702 = vmatpush1.bf16.msra.mxu0 0
    %703 = vmatprep.subr.bf16.mxu0 0
    %704 = vmatpush1.bf16.msra.mxu0 0
    %705 = vmatprep.subr.bf16.mxu0 0
    %706 = vmatpush1.bf16.msra.mxu0 0
    %707 = vmatprep.subr.bf16.mxu0 0
    %708 = vmatpush1.bf16.msra.mxu0 0
    %709 = vmatprep.subr.bf16.mxu0 0
    %710 = vmatpush1.bf16.msra.mxu0 0
    %711 = vmatprep.subr.bf16.mxu0 0
    %712 = vmatpush1.bf16.msra.mxu0 0
    %713 = vmatprep.subr.bf16.mxu0 0
    %714 = vmatpush1.bf16.msra.mxu0 0
    %715 = vmatprep.mubr.bf16.mxu0 0
    %716 = vmatmul.mubr.bf16.gmra.mrb[0].mxu0 %v634
    %v717 = vpop.f32.mrb[0].mxu0
    %v718 = vadd.f32 0.0, %v717
    %v719 = vpop.f32.mrb[0].mxu0
    %v720 = vadd.f32 0.0, %v719
    %v721 = vpop.f32.mrb[0].mxu0
    %v722 = vpop.f32.mrb[0].mxu0
    %723 = vdwg.mxu0
    %v724 = vadd.f32 %v638, %v677
    %v725 = vadd.f32 %v639, %v679
    %v726 = vadd.f32 %v640, %v718
    %v727 = vadd.f32 %v641, %v720
    %v728 = vxor.u32 %v724, 2147483648
    %v729 = vxor.u32 %v725, 2147483648
    %v730 = vxor.u32 %v726, 2147483648
    %v731 = vxor.u32 %v727, 2147483648
    %v732 = vmul.f32 %v728, 1.442695
    %v733 = vpow.pop %v732
    %v734 = vmul.f32 %v729, 1.442695
    %v735 = vpow.pop %v734
    %v736 = vmul.f32 %v730, 1.442695
    %v737 = vpow.pop %v736
    %v738 = vmul.f32 %v731, 1.442695
    %v739 = vpow.pop %v738
    %v740 = vadd.f32 %v733, 1.0
    %v741 = vadd.f32 %v735, 1.0
    %v742 = vadd.f32 %v737, 1.0
    %v743 = vadd.f32 %v739, 1.0
    %v744 = vrcp.pop %v740
    %v745 = vmul.f32 1.0, %v744
    %v746 = vrcp.pop %v741
    %v747 = vmul.f32 1.0, %v746
    %v748 = vrcp.pop %v742
    %v749 = vmul.f32 1.0, %v748
    %v750 = vrcp.pop %v743
    %v751 = vmul.f32 1.0, %v750
    %v752 = vmul.f32 %v751, 2.0
    %v753 = vsub.f32 %v752, 1.0
    %v754 = vmul.f32 %v747, %v631
    %v755 = vmul.f32 %v745, %v753
    %v756 = vadd.f32 %v754, %v755
    %v757 = vtanh.pop %v756
    %v758 = vmul.f32 %v749, %v757
    %v759 = vpack.c.bf16 %v758, %v758
    %s760 = scalar_lea.vmem [#allocation4], 64
    %v761 = vld [vmem:[%s760] sm:$0xff]
    %v762 = vld [vmem:[%s760 + $0x8] sm:$0xff]
    %v763 = vunpack.c.l.bf16 %v761
    %v764 = vunpack.c.h.bf16 %v761
    %v765 = vunpack.c.l.bf16 %v762
    %v766 = vunpack.c.h.bf16 %v762
    %767 = vmatprep.subr.bf16.mxu0 %v204
    %768 = vmatpush1.bf16.msra.mxu0 %v203
    %769 = vmatprep.subr.bf16.mxu0 %v208
    %770 = vmatpush1.bf16.msra.mxu0 %v207
    %771 = vmatprep.subr.bf16.mxu0 %v212
    %772 = vmatpush1.bf16.msra.mxu0 %v211
    %773 = vmatprep.subr.bf16.mxu0 %v216
    %774 = vmatpush1.bf16.msra.mxu0 %v215
    %775 = vmatprep.subr.bf16.mxu0 %v220
    %776 = vmatpush1.bf16.msra.mxu0 %v219
    %777 = vmatprep.subr.bf16.mxu0 %v224
    %778 = vmatpush1.bf16.msra.mxu0 %v223
    %779 = vmatprep.subr.bf16.mxu0 %v228
    %780 = vmatpush1.bf16.msra.mxu0 %v227
    %781 = vmatprep.subr.bf16.mxu0 %v232
    %782 = vmatpush1.bf16.msra.mxu0 %v231
    %783 = vmatprep.subr.bf16.mxu0 0
    %784 = vmatpush1.bf16.msra.mxu0 0
    %785 = vmatprep.subr.bf16.mxu0 0
    %786 = vmatpush1.bf16.msra.mxu0 0
    %787 = vmatprep.subr.bf16.mxu0 0
    %788 = vmatpush1.bf16.msra.mxu0 0
    %789 = vmatprep.subr.bf16.mxu0 0
    %790 = vmatpush1.bf16.msra.mxu0 0
    %791 = vmatprep.subr.bf16.mxu0 0
    %792 = vmatpush1.bf16.msra.mxu0 0
    %793 = vmatprep.subr.bf16.mxu0 0
    %794 = vmatpush1.bf16.msra.mxu0 0
    %795 = vmatprep.subr.bf16.mxu0 0
    %796 = vmatpush1.bf16.msra.mxu0 0
    %797 = vmatprep.subr.bf16.mxu0 0
    %798 = vmatpush1.bf16.msra.mxu0 0
    %799 = vmatprep.mubr.bf16.mxu0 0
    %800 = vmatmul.mubr.bf16.gmra.mrb[0].mxu0 %v759
    %v801 = vpop.f32.mrb[0].mxu0
    %v802 = vadd.f32 0.0, %v801
    %v803 = vpop.f32.mrb[0].mxu0
    %v804 = vadd.f32 0.0, %v803
    %v805 = vpop.f32.mrb[0].mxu0
    %v806 = vpop.f32.mrb[0].mxu0
    %807 = vdwg.mxu0
    %808 = vmatprep.subr.bf16.mxu0 %v206
    %809 = vmatpush1.bf16.msra.mxu0 %v205
    %810 = vmatprep.subr.bf16.mxu0 %v210
    %811 = vmatpush1.bf16.msra.mxu0 %v209
    %812 = vmatprep.subr.bf16.mxu0 %v214
    %813 = vmatpush1.bf16.msra.mxu0 %v213
    %814 = vmatprep.subr.bf16.mxu0 %v218
    %815 = vmatpush1.bf16.msra.mxu0 %v217
    %816 = vmatprep.subr.bf16.mxu0 %v222
    %817 = vmatpush1.bf16.msra.mxu0 %v221
    %818 = vmatprep.subr.bf16.mxu0 %v226
    %819 = vmatpush1.bf16.msra.mxu0 %v225
    %820 = vmatprep.subr.bf16.mxu0 %v230
    %821 = vmatpush1.bf16.msra.mxu0 %v229
    %822 = vmatprep.subr.bf16.mxu0 %v234
    %823 = vmatpush1.bf16.msra.mxu0 %v233
    %824 = vmatprep.subr.bf16.mxu0 0
    %825 = vmatpush1.bf16.msra.mxu0 0
    %826 = vmatprep.subr.bf16.mxu0 0
    %827 = vmatpush1.bf16.msra.mxu0 0
    %828 = vmatprep.subr.bf16.mxu0 0
    %829 = vmatpush1.bf16.msra.mxu0 0
    %830 = vmatprep.subr.bf16.mxu0 0
    %831 = vmatpush1.bf16.msra.mxu0 0
    %832 = vmatprep.subr.bf16.mxu0 0
    %833 = vmatpush1.bf16.msra.mxu0 0
    %834 = vmatprep.subr.bf16.mxu0 0
    %835 = vmatpush1.bf16.msra.mxu0 0
    %836 = vmatprep.subr.bf16.mxu0 0
    %837 = vmatpush1.bf16.msra.mxu0 0
    %838 = vmatprep.subr.bf16.mxu0 0
    %839 = vmatpush1.bf16.msra.mxu0 0
    %840 = vmatprep.mubr.bf16.mxu0 0
    %841 = vmatmul.mubr.bf16.gmra.mrb[0].mxu0 %v759
    %v842 = vpop.f32.mrb[0].mxu0
    %v843 = vadd.f32 0.0, %v842
    %v844 = vpop.f32.mrb[0].mxu0
    %v845 = vadd.f32 0.0, %v844
    %v846 = vpop.f32.mrb[0].mxu0
    %v847 = vpop.f32.mrb[0].mxu0
    %848 = vdwg.mxu0
    %v849 = vadd.f32 %v763, %v802
    %v850 = vadd.f32 %v764, %v804
    %v851 = vadd.f32 %v765, %v843
    %v852 = vadd.f32 %v766, %v845
    %v853 = vxor.u32 %v849, 2147483648
    %v854 = vxor.u32 %v850, 2147483648
    %v855 = vxor.u32 %v851, 2147483648
    %v856 = vxor.u32 %v852, 2147483648
    %v857 = vmul.f32 %v853, 1.442695
    %v858 = vpow.pop %v857
    %v859 = vmul.f32 %v854, 1.442695
    %v860 = vpow.pop %v859
    %v861 = vmul.f32 %v855, 1.442695
    %v862 = vpow.pop %v861
    %v863 = vmul.f32 %v856, 1.442695
    %v864 = vpow.pop %v863
    %v865 = vadd.f32 %v858, 1.0
    %v866 = vadd.f32 %v860, 1.0
    %v867 = vadd.f32 %v862, 1.0
    %v868 = vadd.f32 %v864, 1.0
    %v869 = vrcp.pop %v865
    %v870 = vmul.f32 1.0, %v869
    %v871 = vrcp.pop %v866
    %v872 = vmul.f32 1.0, %v871
    %v873 = vrcp.pop %v867
    %v874 = vmul.f32 1.0, %v873
    %v875 = vrcp.pop %v868
    %v876 = vmul.f32 1.0, %v875
    %v877 = vmul.f32 %v876, 2.0
    %v878 = vsub.f32 %v877, 1.0
    %v879 = vmul.f32 %v872, %v756
    %v880 = vmul.f32 %v870, %v878
    %v881 = vadd.f32 %v879, %v880
    %v882 = vtanh.pop %v881
    %v883 = vmul.f32 %v874, %v882
    %v884 = vpack.c.bf16 %v883, %v883
    %s885 = scalar_lea.vmem [#allocation4], 80
    %v886 = vld [vmem:[%s885] sm:$0xff]
    %v887 = vld [vmem:[%s885 + $0x8] sm:$0xff]
    %v888 = vunpack.c.l.bf16 %v886
    %v889 = vunpack.c.h.bf16 %v886
    %v890 = vunpack.c.l.bf16 %v887
    %v891 = vunpack.c.h.bf16 %v887
    %892 = vmatprep.subr.bf16.mxu0 %v204
    %893 = vmatpush1.bf16.msra.mxu0 %v203
    %894 = vmatprep.subr.bf16.mxu0 %v208
    %895 = vmatpush1.bf16.msra.mxu0 %v207
    %896 = vmatprep.subr.bf16.mxu0 %v212
    %897 = vmatpush1.bf16.msra.mxu0 %v211
    %898 = vmatprep.subr.bf16.mxu0 %v216
    %899 = vmatpush1.bf16.msra.mxu0 %v215
    %900 = vmatprep.subr.bf16.mxu0 %v220
    %901 = vmatpush1.bf16.msra.mxu0 %v219
    %902 = vmatprep.subr.bf16.mxu0 %v224
    %903 = vmatpush1.bf16.msra.mxu0 %v223
    %904 = vmatprep.subr.bf16.mxu0 %v228
    %905 = vmatpush1.bf16.msra.mxu0 %v227
    %906 = vmatprep.subr.bf16.mxu0 %v232
    %907 = vmatpush1.bf16.msra.mxu0 %v231
    %908 = vmatprep.subr.bf16.mxu0 0
    %909 = vmatpush1.bf16.msra.mxu0 0
    %910 = vmatprep.subr.bf16.mxu0 0
    %911 = vmatpush1.bf16.msra.mxu0 0
    %912 = vmatprep.subr.bf16.mxu0 0
    %913 = vmatpush1.bf16.msra.mxu0 0
    %914 = vmatprep.subr.bf16.mxu0 0
    %915 = vmatpush1.bf16.msra.mxu0 0
    %916 = vmatprep.subr.bf16.mxu0 0
    %917 = vmatpush1.bf16.msra.mxu0 0
    %918 = vmatprep.subr.bf16.mxu0 0
    %919 = vmatpush1.bf16.msra.mxu0 0
    %920 = vmatprep.subr.bf16.mxu0 0
    %921 = vmatpush1.bf16.msra.mxu0 0
    %922 = vmatprep.subr.bf16.mxu0 0
    %923 = vmatpush1.bf16.msra.mxu0 0
    %924 = vmatprep.mubr.bf16.mxu0 0
    %925 = vmatmul.mubr.bf16.gmra.mrb[0].mxu0 %v884
    %v926 = vpop.f32.mrb[0].mxu0
    %v927 = vadd.f32 0.0, %v926
    %v928 = vpop.f32.mrb[0].mxu0
    %v929 = vadd.f32 0.0, %v928
    %v930 = vpop.f32.mrb[0].mxu0
    %v931 = vpop.f32.mrb[0].mxu0
    %932 = vdwg.mxu0
    %933 = vmatprep.subr.bf16.mxu0 %v206
    %934 = vmatpush1.bf16.msra.mxu0 %v205
    %935 = vmatprep.subr.bf16.mxu0 %v210
    %936 = vmatpush1.bf16.msra.mxu0 %v209
    %937 = vmatprep.subr.bf16.mxu0 %v214
    %938 = vmatpush1.bf16.msra.mxu0 %v213
    %939 = vmatprep.subr.bf16.mxu0 %v218
    %940 = vmatpush1.bf16.msra.mxu0 %v217
    %941 = vmatprep.subr.bf16.mxu0 %v222
    %942 = vmatpush1.bf16.msra.mxu0 %v221
    %943 = vmatprep.subr.bf16.mxu0 %v226
    %944 = vmatpush1.bf16.msra.mxu0 %v225
    %945 = vmatprep.subr.bf16.mxu0 %v230
    %946 = vmatpush1.bf16.msra.mxu0 %v229
    %947 = vmatprep.subr.bf16.mxu0 %v234
    %948 = vmatpush1.bf16.msra.mxu0 %v233
    %949 = vmatprep.subr.bf16.mxu0 0
    %950 = vmatpush1.bf16.msra.mxu0 0
    %951 = vmatprep.subr.bf16.mxu0 0
    %952 = vmatpush1.bf16.msra.mxu0 0
    %953 = vmatprep.subr.bf16.mxu0 0
    %954 = vmatpush1.bf16.msra.mxu0 0
    %955 = vmatprep.subr.bf16.mxu0 0
    %956 = vmatpush1.bf16.msra.mxu0 0
    %957 = vmatprep.subr.bf16.mxu0 0
    %958 = vmatpush1.bf16.msra.mxu0 0
    %959 = vmatprep.subr.bf16.mxu0 0
    %960 = vmatpush1.bf16.msra.mxu0 0
    %961 = vmatprep.subr.bf16.mxu0 0
    %962 = vmatpush1.bf16.msra.mxu0 0
    %963 = vmatprep.subr.bf16.mxu0 0
    %964 = vmatpush1.bf16.msra.mxu0 0
    %965 = vmatprep.mubr.bf16.mxu0 0
    %966 = vmatmul.mubr.bf16.gmra.mrb[0].mxu0 %v884
    %v967 = vpop.f32.mrb[0].mxu0
    %v968 = vadd.f32 0.0, %v967
    %v969 = vpop.f32.mrb[0].mxu0
    %v970 = vadd.f32 0.0, %v969
    %v971 = vpop.f32.mrb[0].mxu0
    %v972 = vpop.f32.mrb[0].mxu0
    %973 = vdwg.mxu0
    %v974 = vadd.f32 %v888, %v927
    %v975 = vadd.f32 %v889, %v929
    %v976 = vadd.f32 %v890, %v968
    %v977 = vadd.f32 %v891, %v970
    %v978 = vxor.u32 %v974, 2147483648
    %v979 = vxor.u32 %v975, 2147483648
    %v980 = vxor.u32 %v976, 2147483648
    %v981 = vxor.u32 %v977, 2147483648
    %v982 = vmul.f32 %v978, 1.442695
    %v983 = vpow.pop %v982
    %v984 = vmul.f32 %v979, 1.442695
    %v985 = vpow.pop %v984
    %v986 = vmul.f32 %v980, 1.442695
    %v987 = vpow.pop %v986
    %v988 = vmul.f32 %v981, 1.442695
    %v989 = vpow.pop %v988
    %v990 = vadd.f32 %v983, 1.0
    %v991 = vadd.f32 %v985, 1.0
    %v992 = vadd.f32 %v987, 1.0
    %v993 = vadd.f32 %v989, 1.0
    %v994 = vrcp.pop %v990
    %v995 = vmul.f32 1.0, %v994
    %v996 = vrcp.pop %v991
    %v997 = vmul.f32 1.0, %v996
    %v998 = vrcp.pop %v992
    %v999 = vmul.f32 1.0, %v998
    %v1000 = vrcp.pop %v993
    %v1001 = vmul.f32 1.0, %v1000
    %v1002 = vmul.f32 %v1001, 2.0
    %v1003 = vsub.f32 %v1002, 1.0
    %v1004 = vmul.f32 %v997, %v881
    %v1005 = vmul.f32 %v995, %v1003
    %v1006 = vadd.f32 %v1004, %v1005
    %v1007 = vtanh.pop %v1006
    %v1008 = vmul.f32 %v999, %v1007
    %v1009 = vpack.c.bf16 %v1008, %v1008
    %s1010 = scalar_lea.vmem [#allocation4], 96
    %v1011 = vld [vmem:[%s1010] sm:$0xff]
    %v1012 = vld [vmem:[%s1010 + $0x8] sm:$0xff]
    %v1013 = vunpack.c.l.bf16 %v1011
    %v1014 = vunpack.c.h.bf16 %v1011
    %v1015 = vunpack.c.l.bf16 %v1012
    %v1016 = vunpack.c.h.bf16 %v1012
    %1017 = vmatprep.subr.bf16.mxu0 %v204
    %1018 = vmatpush1.bf16.msra.mxu0 %v203
    %1019 = vmatprep.subr.bf16.mxu0 %v208
    %1020 = vmatpush1.bf16.msra.mxu0 %v207
    %1021 = vmatprep.subr.bf16.mxu0 %v212
    %1022 = vmatpush1.bf16.msra.mxu0 %v211
    %1023 = vmatprep.subr.bf16.mxu0 %v216
    %1024 = vmatpush1.bf16.msra.mxu0 %v215
    %1025 = vmatprep.subr.bf16.mxu0 %v220
    %1026 = vmatpush1.bf16.msra.mxu0 %v219
    %1027 = vmatprep.subr.bf16.mxu0 %v224
    %1028 = vmatpush1.bf16.msra.mxu0 %v223
    %1029 = vmatprep.subr.bf16.mxu0 %v228
    %1030 = vmatpush1.bf16.msra.mxu0 %v227
    %1031 = vmatprep.subr.bf16.mxu0 %v232
    %1032 = vmatpush1.bf16.msra.mxu0 %v231
    %1033 = vmatprep.subr.bf16.mxu0 0
    %1034 = vmatpush1.bf16.msra.mxu0 0
    %1035 = vmatprep.subr.bf16.mxu0 0
    %1036 = vmatpush1.bf16.msra.mxu0 0
    %1037 = vmatprep.subr.bf16.mxu0 0
    %1038 = vmatpush1.bf16.msra.mxu0 0
    %1039 = vmatprep.subr.bf16.mxu0 0
    %1040 = vmatpush1.bf16.msra.mxu0 0
    %1041 = vmatprep.subr.bf16.mxu0 0
    %1042 = vmatpush1.bf16.msra.mxu0 0
    %1043 = vmatprep.subr.bf16.mxu0 0
    %1044 = vmatpush1.bf16.msra.mxu0 0
    %1045 = vmatprep.subr.bf16.mxu0 0
    %1046 = vmatpush1.bf16.msra.mxu0 0
    %1047 = vmatprep.subr.bf16.mxu0 0
    %1048 = vmatpush1.bf16.msra.mxu0 0
    %1049 = vmatprep.mubr.bf16.mxu0 0
    %1050 = vmatmul.mubr.bf16.gmra.mrb[0].mxu0 %v1009
    %v1051 = vpop.f32.mrb[0].mxu0
    %v1052 = vadd.f32 0.0, %v1051
    %v1053 = vpop.f32.mrb[0].mxu0
    %v1054 = vadd.f32 0.0, %v1053
    %v1055 = vpop.f32.mrb[0].mxu0
    %v1056 = vpop.f32.mrb[0].mxu0
    %1057 = vdwg.mxu0
    %1058 = vmatprep.subr.bf16.mxu0 %v206
    %1059 = vmatpush1.bf16.msra.mxu0 %v205
    %1060 = vmatprep.subr.bf16.mxu0 %v210
    %1061 = vmatpush1.bf16.msra.mxu0 %v209
    %1062 = vmatprep.subr.bf16.mxu0 %v214
    %1063 = vmatpush1.bf16.msra.mxu0 %v213
    %1064 = vmatprep.subr.bf16.mxu0 %v218
    %1065 = vmatpush1.bf16.msra.mxu0 %v217
    %1066 = vmatprep.subr.bf16.mxu0 %v222
    %1067 = vmatpush1.bf16.msra.mxu0 %v221
    %1068 = vmatprep.subr.bf16.mxu0 %v226
    %1069 = vmatpush1.bf16.msra.mxu0 %v225
    %1070 = vmatprep.subr.bf16.mxu0 %v230
    %1071 = vmatpush1.bf16.msra.mxu0 %v229
    %1072 = vmatprep.subr.bf16.mxu0 %v234
    %1073 = vmatpush1.bf16.msra.mxu0 %v233
    %1074 = vmatprep.subr.bf16.mxu0 0
    %1075 = vmatpush1.bf16.msra.mxu0 0
    %1076 = vmatprep.subr.bf16.mxu0 0
    %1077 = vmatpush1.bf16.msra.mxu0 0
    %1078 = vmatprep.subr.bf16.mxu0 0
    %1079 = vmatpush1.bf16.msra.mxu0 0
    %1080 = vmatprep.subr.bf16.mxu0 0
    %1081 = vmatpush1.bf16.msra.mxu0 0
    %1082 = vmatprep.subr.bf16.mxu0 0
    %1083 = vmatpush1.bf16.msra.mxu0 0
    %1084 = vmatprep.subr.bf16.mxu0 0
    %1085 = vmatpush1.bf16.msra.mxu0 0
    %1086 = vmatprep.subr.bf16.mxu0 0
    %1087 = vmatpush1.bf16.msra.mxu0 0
    %1088 = vmatprep.subr.bf16.mxu0 0
    %1089 = vmatpush1.bf16.msra.mxu0 0
    %1090 = vmatprep.mubr.bf16.mxu0 0
    %1091 = vmatmul.mubr.bf16.gmra.mrb[0].mxu0 %v1009
    %v1092 = vpop.f32.mrb[0].mxu0
    %v1093 = vadd.f32 0.0, %v1092
    %v1094 = vpop.f32.mrb[0].mxu0
    %v1095 = vadd.f32 0.0, %v1094
    %v1096 = vpop.f32.mrb[0].mxu0
    %v1097 = vpop.f32.mrb[0].mxu0
    %1098 = vdwg.mxu0
    %v1099 = vadd.f32 %v1013, %v1052
    %v1100 = vadd.f32 %v1014, %v1054
    %v1101 = vadd.f32 %v1015, %v1093
    %v1102 = vadd.f32 %v1016, %v1095
    %v1103 = vxor.u32 %v1099, 2147483648
    %v1104 = vxor.u32 %v1100, 2147483648
    %v1105 = vxor.u32 %v1101, 2147483648
    %v1106 = vxor.u32 %v1102, 2147483648
    %v1107 = vmul.f32 %v1103, 1.442695
    %v1108 = vpow.pop %v1107
    %v1109 = vmul.f32 %v1104, 1.442695
    %v1110 = vpow.pop %v1109
    %v1111 = vmul.f32 %v1105, 1.442695
    %v1112 = vpow.pop %v1111
    %v1113 = vmul.f32 %v1106, 1.442695
    %v1114 = vpow.pop %v1113
    %v1115 = vadd.f32 %v1108, 1.0
    %v1116 = vadd.f32 %v1110, 1.0
    %v1117 = vadd.f32 %v1112, 1.0
    %v1118 = vadd.f32 %v1114, 1.0
    %v1119 = vrcp.pop %v1115
    %v1120 = vmul.f32 1.0, %v1119
    %v1121 = vrcp.pop %v1116
    %v1122 = vmul.f32 1.0, %v1121
    %v1123 = vrcp.pop %v1117
    %v1124 = vmul.f32 1.0, %v1123
    %v1125 = vrcp.pop %v1118
    %v1126 = vmul.f32 1.0, %v1125
    %v1127 = vmul.f32 %v1126, 2.0
    %v1128 = vsub.f32 %v1127, 1.0
    %v1129 = vmul.f32 %v1122, %v1006
    %v1130 = vmul.f32 %v1120, %v1128
    %v1131 = vadd.f32 %v1129, %v1130
    %v1132 = vtanh.pop %v1131
    %v1133 = vmul.f32 %v1124, %v1132
    %v1134 = vpack.c.bf16 %v1133, %v1133
    %s1135 = scalar_lea.vmem [#allocation4], 112
    %v1136 = vld [vmem:[%s1135] sm:$0xff]
    %v1137 = vld [vmem:[%s1135 + $0x8] sm:$0xff]
    %v1138 = vunpack.c.l.bf16 %v1136
    %v1139 = vunpack.c.h.bf16 %v1136
    %v1140 = vunpack.c.l.bf16 %v1137
    %v1141 = vunpack.c.h.bf16 %v1137
    %1142 = vmatprep.subr.bf16.mxu0 %v204
    %1143 = vmatpush1.bf16.msra.mxu0 %v203
    %1144 = vmatprep.subr.bf16.mxu0 %v208
    %1145 = vmatpush1.bf16.msra.mxu0 %v207
    %1146 = vmatprep.subr.bf16.mxu0 %v212
    %1147 = vmatpush1.bf16.msra.mxu0 %v211
    %1148 = vmatprep.subr.bf16.mxu0 %v216
    %1149 = vmatpush1.bf16.msra.mxu0 %v215
    %1150 = vmatprep.subr.bf16.mxu0 %v220
    %1151 = vmatpush1.bf16.msra.mxu0 %v219
    %1152 = vmatprep.subr.bf16.mxu0 %v224
    %1153 = vmatpush1.bf16.msra.mxu0 %v223
    %1154 = vmatprep.subr.bf16.mxu0 %v228
    %1155 = vmatpush1.bf16.msra.mxu0 %v227
    %1156 = vmatprep.subr.bf16.mxu0 %v232
    %1157 = vmatpush1.bf16.msra.mxu0 %v231
    %1158 = vmatprep.subr.bf16.mxu0 0
    %1159 = vmatpush1.bf16.msra.mxu0 0
    %1160 = vmatprep.subr.bf16.mxu0 0
    %1161 = vmatpush1.bf16.msra.mxu0 0
    %1162 = vmatprep.subr.bf16.mxu0 0
    %1163 = vmatpush1.bf16.msra.mxu0 0
    %1164 = vmatprep.subr.bf16.mxu0 0
    %1165 = vmatpush1.bf16.msra.mxu0 0
    %1166 = vmatprep.subr.bf16.mxu0 0
    %1167 = vmatpush1.bf16.msra.mxu0 0
    %1168 = vmatprep.subr.bf16.mxu0 0
    %1169 = vmatpush1.bf16.msra.mxu0 0
    %1170 = vmatprep.subr.bf16.mxu0 0
    %1171 = vmatpush1.bf16.msra.mxu0 0
    %1172 = vmatprep.subr.bf16.mxu0 0
    %1173 = vmatpush1.bf16.msra.mxu0 0
    %1174 = vmatprep.mubr.bf16.mxu0 0
    %1175 = vmatmul.mubr.bf16.gmra.mrb[0].mxu0 %v1134
    %v1176 = vpop.f32.mrb[0].mxu0
    %v1177 = vadd.f32 0.0, %v1176
    %v1178 = vpop.f32.mrb[0].mxu0
    %v1179 = vadd.f32 0.0, %v1178
    %v1180 = vpop.f32.mrb[0].mxu0
    %v1181 = vpop.f32.mrb[0].mxu0
    %1182 = vdwg.mxu0
    %1183 = vmatprep.subr.bf16.mxu0 %v206
    %1184 = vmatpush1.bf16.msra.mxu0 %v205
    %1185 = vmatprep.subr.bf16.mxu0 %v210
    %1186 = vmatpush1.bf16.msra.mxu0 %v209
    %1187 = vmatprep.subr.bf16.mxu0 %v214
    %1188 = vmatpush1.bf16.msra.mxu0 %v213
    %1189 = vmatprep.subr.bf16.mxu0 %v218
    %1190 = vmatpush1.bf16.msra.mxu0 %v217
    %1191 = vmatprep.subr.bf16.mxu0 %v222
    %1192 = vmatpush1.bf16.msra.mxu0 %v221
    %1193 = vmatprep.subr.bf16.mxu0 %v226
    %1194 = vmatpush1.bf16.msra.mxu0 %v225
    %1195 = vmatprep.subr.bf16.mxu0 %v230
    %1196 = vmatpush1.bf16.msra.mxu0 %v229
    %1197 = vmatprep.subr.bf16.mxu0 %v234
    %1198 = vmatpush1.bf16.msra.mxu0 %v233
    %1199 = vmatprep.subr.bf16.mxu0 0
    %1200 = vmatpush1.bf16.msra.mxu0 0
    %1201 = vmatprep.subr.bf16.mxu0 0
    %1202 = vmatpush1.bf16.msra.mxu0 0
    %1203 = vmatprep.subr.bf16.mxu0 0
    %1204 = vmatpush1.bf16.msra.mxu0 0
    %1205 = vmatprep.subr.bf16.mxu0 0
    %1206 = vmatpush1.bf16.msra.mxu0 0
    %1207 = vmatprep.subr.bf16.mxu0 0
    %1208 = vmatpush1.bf16.msra.mxu0 0
    %1209 = vmatprep.subr.bf16.mxu0 0
    %1210 = vmatpush1.bf16.msra.mxu0 0
    %1211 = vmatprep.subr.bf16.mxu0 0
    %1212 = vmatpush1.bf16.msra.mxu0 0
    %1213 = vmatprep.subr.bf16.mxu0 0
    %1214 = vmatpush1.bf16.msra.mxu0 0
    %1215 = vmatprep.mubr.bf16.mxu0 0
    %1216 = vmatmul.mubr.bf16.gmra.mrb[0].mxu0 %v1134
    %v1217 = vpop.f32.mrb[0].mxu0
    %v1218 = vadd.f32 0.0, %v1217
    %v1219 = vpop.f32.mrb[0].mxu0
    %v1220 = vadd.f32 0.0, %v1219
    %v1221 = vpop.f32.mrb[0].mxu0
    %v1222 = vpop.f32.mrb[0].mxu0
    %1223 = vdwg.mxu0
    %v1224 = vadd.f32 %v1138, %v1177
    %v1225 = vadd.f32 %v1139, %v1179
    %v1226 = vadd.f32 %v1140, %v1218
    %v1227 = vadd.f32 %v1141, %v1220
    %v1228 = vxor.u32 %v1224, 2147483648
    %v1229 = vxor.u32 %v1225, 2147483648
    %v1230 = vxor.u32 %v1226, 2147483648
    %v1231 = vxor.u32 %v1227, 2147483648
    %v1232 = vmul.f32 %v1228, 1.442695
    %v1233 = vpow.pop %v1232
    %v1234 = vmul.f32 %v1229, 1.442695
    %v1235 = vpow.pop %v1234
    %v1236 = vmul.f32 %v1230, 1.442695
    %v1237 = vpow.pop %v1236
    %v1238 = vmul.f32 %v1231, 1.442695
    %v1239 = vpow.pop %v1238
    %v1240 = vadd.f32 %v1233, 1.0
    %v1241 = vadd.f32 %v1235, 1.0
    %v1242 = vadd.f32 %v1237, 1.0
    %v1243 = vadd.f32 %v1239, 1.0
    %v1244 = vrcp.pop %v1240
    %v1245 = vmul.f32 1.0, %v1244
    %v1246 = vrcp.pop %v1241
    %v1247 = vmul.f32 1.0, %v1246
    %v1248 = vrcp.pop %v1242
    %v1249 = vmul.f32 1.0, %v1248
    %v1250 = vrcp.pop %v1243
    %v1251 = vmul.f32 1.0, %v1250
    %v1252 = vmul.f32 %v1251, 2.0
    %v1253 = vsub.f32 %v1252, 1.0
    %v1254 = vmul.f32 %v1247, %v1131
    %v1255 = vmul.f32 %v1245, %v1253
    %v1256 = vadd.f32 %v1254, %v1255
    %v1257 = vtanh.pop %v1256
    %v1258 = vmul.f32 %v1249, %v1257
    %1259 = vst [vmem:[#allocation2] sm:$0xff] %v1258
    %1260 = vst [vmem:[#allocation3] sm:$0xff] %v1256
    // Predicated region
    $region34: #{tpu_custom_call.1} parent=1 // pred_check
      %p1261 = pneg %p60
    $region35: #{tpu_custom_call.1} parent=1 // pred_check_branch
      %1263 = sbr.rel (%p1261) target = $region37
    $region36: #{tpu_custom_call.1} parent=1 // pred_region
      %v1264 = vld [vmem:[#allocation2] sm:$0xff]
      %v1265 = vpack.c.bf16 %v1264, %v1264
      %v1266 = vld [vmem:[#allocation9] sm:$0xf]
      %v1267 = vld [vmem:[#allocation9 + $0x4] sm:$0xf]
      %v1268 = vld [vmem:[#allocation9 + $0x8] sm:$0xf]
      %v1269 = vld [vmem:[#allocation9 + $0xc] sm:$0xf]
      %v1270 = vld [vmem:[#allocation9 + $0x10] sm:$0xf]
      %v1271 = vld [vmem:[#allocation9 + $0x14] sm:$0xf]
      %v1272 = vld [vmem:[#allocation9 + $0x18] sm:$0xf]
      %v1273 = vld [vmem:[#allocation9 + $0x1c] sm:$0xf]
      %v1274 = vld [vmem:[#allocation9 + $0x20] sm:$0xf]
      %v1275 = vld [vmem:[#allocation9 + $0x24] sm:$0xf]
      %v1276 = vld [vmem:[#allocation9 + $0x28] sm:$0xf]
      %v1277 = vld [vmem:[#allocation9 + $0x2c] sm:$0xf]
      %v1278 = vld [vmem:[#allocation9 + $0x30] sm:$0xf]
      %v1279 = vld [vmem:[#allocation9 + $0x34] sm:$0xf]
      %v1280 = vld [vmem:[#allocation9 + $0x38] sm:$0xf]
      %v1281 = vld [vmem:[#allocation9 + $0x3c] sm:$0xf]
      %v1282 = vld [vmem:[%s3] sm:$0x1]
      %v1284 = vlaneseq
      %v1285 = vshrl.u32 %v1284, 7
      %v1286 = vsub.s32 0, %v1285
      %v1287 = vrot.slane %v1282, %v1286
      %v1305 = vunpack.c.l.b16 %v1266
      %v1306 = vunpack.c.l.b16 %v1267
      %v1307 = vunpack.c.l.b16 %v1268
      %v1308 = vunpack.c.l.b16 %v1269
      %v1309 = vunpack.c.l.b16 %v1270
      %v1310 = vunpack.c.l.b16 %v1271
      %v1311 = vunpack.c.l.b16 %v1272
      %v1312 = vunpack.c.l.b16 %v1273
      %v1313 = vunpack.c.l.b16 %v1274
      %v1314 = vunpack.c.l.b16 %v1275
      %v1315 = vunpack.c.l.b16 %v1276
      %v1316 = vunpack.c.l.b16 %v1277
      %v1317 = vunpack.c.l.b16 %v1278
      %v1318 = vunpack.c.l.b16 %v1279
      %v1319 = vunpack.c.l.b16 %v1280
      %v1320 = vunpack.c.l.b16 %v1281
      %v1321 = vpack.c.b16 %v1306, %v1305
      %v1322 = vpack.c.b16 %v1308, %v1307
      %v1323 = vpack.c.b16 %v1310, %v1309
      %v1324 = vpack.c.b16 %v1312, %v1311
      %v1325 = vpack.c.b16 %v1314, %v1313
      %v1326 = vpack.c.b16 %v1316, %v1315
      %v1327 = vpack.c.b16 %v1318, %v1317
      %v1328 = vpack.c.b16 %v1320, %v1319
      %1337 = vmatprep.subr.bf16.mxu0 0
      %1338 = vmatpush1.bf16.msra.mxu0 %v1321
      %1339 = vmatprep.subr.bf16.mxu0 0
      %1340 = vmatpush1.bf16.msra.mxu0 %v1322
      %1341 = vmatprep.subr.bf16.mxu0 0
      %1342 = vmatpush1.bf16.msra.mxu0 %v1323
      %1343 = vmatprep.subr.bf16.mxu0 0
      %1344 = vmatpush1.bf16.msra.mxu0 %v1324
      %1345 = vmatprep.subr.bf16.mxu0 0
      %1346 = vmatpush1.bf16.msra.mxu0 %v1325
      %1347 = vmatprep.subr.bf16.mxu0 0
      %1348 = vmatpush1.bf16.msra.mxu0 %v1326
      %1349 = vmatprep.subr.bf16.mxu0 0
      %1350 = vmatpush1.bf16.msra.mxu0 %v1327
      %1351 = vmatprep.subr.bf16.mxu0 0
      %1352 = vmatpush1.bf16.msra.mxu0 %v1328
      %1353 = vmatprep.subr.bf16.mxu0 0
      %1354 = vmatpush1.bf16.msra.mxu0 0
      %1355 = vmatprep.subr.bf16.mxu0 0
      %1356 = vmatpush1.bf16.msra.mxu0 0
      %1357 = vmatprep.subr.bf16.mxu0 0
      %1358 = vmatpush1.bf16.msra.mxu0 0
      %1359 = vmatprep.subr.bf16.mxu0 0
      %1360 = vmatpush1.bf16.msra.mxu0 0
      %1361 = vmatprep.subr.bf16.mxu0 0
      %1362 = vmatpush1.bf16.msra.mxu0 0
      %1363 = vmatprep.subr.bf16.mxu0 0
      %1364 = vmatpush1.bf16.msra.mxu0 0
      %1365 = vmatprep.subr.bf16.mxu0 0
      %1366 = vmatpush1.bf16.msra.mxu0 0
      %1367 = vmatprep.subr.bf16.mxu0 0
      %1368 = vmatpush1.bf16.msra.mxu0 0
      %1369 = vmatprep.mubr.bf16.mxu0 0
      %1370 = vmatmul.mubr.bf16.gmra.mrb[0].mxu0 %v1265
      %v1371 = vpop.f32.mrb[0].mxu0
      %v1372 = vadd.f32 %v1287, %v1371
      %v1373 = vpop.f32.mrb[0].mxu0
      %v1374 = vpop.f32.mrb[0].mxu0
      %v1375 = vpop.f32.mrb[0].mxu0
      %1376 = vdwg.mxu0
      %v1377 = vxor.u32 %v1372, 2147483648
      %v1378 = vmul.f32 %v1377, 1.442695
      %v1379 = vpow.pop %v1378
      %v1380 = vadd.f32 %v1379, 1.0
      %v1381 = vrcp.pop %v1380
      %v1382 = vmul.f32 1.0, %v1381
      %1383 = vst [vmem:[#allocation10] sm:$0xff] %v1382
    $region37: #{tpu_custom_call.1} parent=1 // pred_fallthru
      _
    // Predicated region
    $region38: #{tpu_custom_call.1} parent=1 // pred_check
      _
    $region39: #{tpu_custom_call.1} parent=1 // pred_check_branch
      %1385 = sbr.rel (0) target = $region41
    $region40: #{tpu_custom_call.1} parent=1 // pred_region
      %s1387 = ssub.s32 128, 128
      %1388 = vsyncadd [#allocation6], %s1387
      %s1390 = sshll.u32 [#allocation10], 4
      %s1391 = int_to_ptr.vmem [resolvable:$true] %s1390
      %1393 = dma.vmem_to_hbm [thread:$0]  %s1391, 128, %s4, [#allocation6]
    $region41: #{tpu_custom_call.1} parent=1 // pred_fallthru
      _
    // Predicated region
    $region42: #{tpu_custom_call.1} parent=1 // pred_check
      _
    $region43: #{tpu_custom_call.1} parent=1 // pred_check_branch
      %1395 = sbr.rel (0) target = $region45
    $region44: #{tpu_custom_call.1} parent=1 // pred_region
      %1396 = dma.done [#allocation6], 128
    $region45: #{tpu_custom_call.1} parent=1 // pred_fallthru
      _
    %1397 = vsyncpa [#allocation5], 1
    %1398 = vsyncpa [#allocation8], 1
    %1399 = vsyncpa [#allocation6], 1

</llo_original>
